<compile_context>
chip_gen: v7x
topology: tpu7x:2x2x1
jax: 0.10.0
libtpu: 0.0.40
codegen_flags: <defaults>
</compile_context>

<pallas_src>
import math
import functools

import jax
import jax.numpy as jnp
from jax import lax
from jax.experimental import pallas as pl
from jax.experimental.pallas import tpu as pltpu


def _causal_attn_kernel(x_ref, wqkv_ref, bqkv_ref, wp_ref, bp_ref,
                        *rest, n_head, head_dim, batch, seq_len, save_attn):
    """Single grid step: all batches/heads processed in one call (fits VMEM).

    x_ref    : (B*T, C)   f32    flattened input
    wqkv_ref : (C, 3C)    bf16   fused [Wq*scale | Wk | Wv]
    bqkv_ref : (1, 3C)    f32    fused [bq*scale | bk | bv]
    wp_ref   : (C, C)     bf16   output projection weight
    bp_ref   : (1, C)     f32    output projection bias
    rest     : y_ref (B*T, C) f32 [, att_ref (B, T, H*T) f32], qkv_scratch
    """
    if save_attn:
        y_ref, att_ref, qkv_sc = rest
    else:
        y_ref, qkv_sc = rest
        att_ref = None

    T, hd, H, B = seq_len, head_dim, n_head, batch
    C = H * hd
    bf16 = jnp.bfloat16

    # ---- fused Q/K/V projection: one bf16 MXU matmul, f32 accumulation ----
    x_bf = x_ref[...].astype(bf16)                                     # (B*T, C)
    qkv = jnp.dot(x_bf, wqkv_ref[...],
                  preferred_element_type=jnp.float32) + bqkv_ref[...]  # (B*T, 3C)

    # Round-trip through a VMEM scratch so the per-(batch, head) windows below
    # are plain sub-vector loads rather than lane rotates/selects of a live
    # register value (C=32, hd=8 slices are all lane-unaligned otherwise).
    qkv_sc[...] = qkv

    # ---- additive causal mask (torch.tril equivalent), built once ----
    row = lax.broadcasted_iota(jnp.int32, (T, T), 0)
    col = lax.broadcasted_iota(jnp.int32, (T, T), 1)
    mask_add = jnp.where(row >= col, 0.0, -1e30).astype(jnp.float32)

    # Hoisted invariant reads (JAX does not CSE broadcast_in_dim).
    wp_bf = wp_ref[...]                                                # (C, C)
    bp = bp_ref[...]                                                   # (1, C)

    y_rows = []
    for b in range(B):                       # static (B=2) -> unrolled
        r0 = b * T
        yh_list = []
        p_list = []
        for h in range(H):                   # static (H=4) -> unrolled
            c0 = h * hd
            qh = qkv_sc[r0:r0 + T, 0 * C + c0:0 * C + c0 + hd].astype(bf16)
            kh = qkv_sc[r0:r0 + T, 1 * C + c0:1 * C + c0 + hd].astype(bf16)
            vh = qkv_sc[r0:r0 + T, 2 * C + c0:2 * C + c0 + hd].astype(bf16)

            # q @ k^T via dot_general contracting head_dim of both operands.
            s = lax.dot_general(qh, kh, (((1,), (1,)), ((), ())),
                                preferred_element_type=jnp.float32)    # (T, T)
            s = s + mask_add                 # 1/sqrt(hd) already folded into Wq

            # numerically-stable f32 softmax; exact divide (PyTorch parity).
            m = jnp.max(s, axis=-1, keepdims=True)
            e = jnp.exp(s - m)
            p = e / jnp.sum(e, axis=-1, keepdims=True)                 # (T, T)
            if save_attn:
                p_list.append(p)             # attn_save (pre-dropout probs)

            # attn_drop is identity in eval mode.
            yh_list.append(jnp.dot(p.astype(bf16), vh,
                                   preferred_element_type=jnp.float32))  # (T, hd)

        y_rows.append(jnp.concatenate(yh_list, axis=-1))               # (T, C)
        if save_attn:
            # One wide (T, H*T) store per batch instead of H narrow stores.
            att_ref[b] = jnp.concatenate(p_list, axis=-1)

    # ---- single output projection over the whole (B*T, C) slab ----
    # (resid_drop is identity in eval mode.)
    y_heads = jnp.concatenate(y_rows, axis=0).astype(bf16)             # (B*T, C)
    y_ref[...] = jnp.dot(y_heads, wp_bf,
                         preferred_element_type=jnp.float32) + bp


def causal_self_attention(x, params, n_head, *, save_attn=True):
    """x: (B, T, C) f32.  Returns (y, attn_save) matching the PyTorch module.
    attn_save is None when save_attn=False (skips the O(B*H*T^2) HBM dump)."""
    B, T, C = x.shape
    assert C % n_head == 0
    head_dim = C // n_head
    wq, bq, wk, bk, wv, bv, wp, bp = params

    # One-time parameter transform (precomputed/cached in a real model): fold
    # the 1/sqrt(head_dim) attention scale into the Q projection, fuse the
    # three projections, and cast weights to bf16 (halves weight DMA; MXU is
    # bf16-native).  Biases stay f32 (added after f32 accumulation).
    scale = 1.0 / math.sqrt(head_dim)
    wqkv = jnp.concatenate([wq * scale, wk, wv], axis=1).astype(jnp.bfloat16)
    bqkv = jnp.concatenate([bq * scale, bk, bv], axis=1)
    wp_bf = wp.astype(jnp.bfloat16)
    x2d = x.reshape(B * T, C)

    kernel = functools.partial(_causal_attn_kernel, n_head=n_head,
                               head_dim=head_dim, batch=B, seq_len=T,
                               save_attn=save_attn)

    def full(shape):
        return pl.BlockSpec(shape, lambda i, _s=shape: (0,) * len(_s))

    in_specs = [
        full((B * T, C)),        # x (flattened, f32)
        full((C, 3 * C)),        # fused qkv weight (bf16)
        full((1, 3 * C)),        # fused qkv bias (f32)
        full((C, C)),            # proj weight (bf16)
        full((1, C)),            # proj bias (f32)
    ]

    if save_attn:
        out_shape = (jax.ShapeDtypeStruct((B * T, C), jnp.float32),
                     jax.ShapeDtypeStruct((B, T, n_head * T), jnp.float32))
        out_specs = (full((B * T, C)), full((B, T, n_head * T)))
    else:
        out_shape = jax.ShapeDtypeStruct((B * T, C), jnp.float32)
        out_specs = full((B * T, C))

    outs = pl.pallas_call(
        kernel,
        out_shape=out_shape,
        grid_spec=pltpu.PrefetchScalarGridSpec(
            num_scalar_prefetch=0,
            # Collapsed grid: per-step work is far below the ~0.35us/step grid
            # overhead at these shapes, so one step on one TensorCore wins.
            grid=(1,),
            in_specs=in_specs,
            out_specs=out_specs,
            scratch_shapes=[pltpu.VMEM((B * T, 3 * C), jnp.float32)],
        ),
        compiler_params=pltpu.CompilerParams(dimension_semantics=("arbitrary",)),
    )(x2d, wqkv, bqkv, wp_bf, bp)

    if save_attn:
        y2d, att_wide = outs
        # (B, T, H*T) -> (B, H, T, T): layout plumbing done outside the kernel.
        att = att_wide.reshape(B, T, n_head, T).transpose(0, 2, 1, 3)
    else:
        y2d, att = outs, None

    return y2d.reshape(B, T, C), att


def _reference(x, params, n_head):
    """Plain-JAX (f32) replica of the PyTorch forward for correctness checking."""
    wq, bq, wk, bk, wv, bv, wp, bp = params
    B, T, C = x.shape
    hd = C // n_head
    q = (x @ wq + bq).reshape(B, T, n_head, hd).transpose(0, 2, 1, 3)
    k = (x @ wk + bk).reshape(B, T, n_head, hd).transpose(0, 2, 1, 3)
    v = (x @ wv + bv).reshape(B, T, n_head, hd).transpose(0, 2, 1, 3)
    att = jnp.einsum("bhqd,bhkd->bhqk", q, k) * (1.0 / math.sqrt(hd))
    mask = jnp.tril(jnp.ones((T, T), dtype=bool))
    att = jnp.where(mask[None, None], att, -jnp.inf)
    att = jax.nn.softmax(att, axis=-1)
    y = jnp.einsum("bhqk,bhkd->bhqd", att, v).transpose(0, 2, 1, 3).reshape(B, T, C)
    y = y @ wp + bp
    return y, att


if __name__ == "__main__":
    # config: n_embd=32, n_head=4, block_size=8  -> B=2, T=8, C=32
    B, T, C, n_head = 2, 8, 32, 4

    key = jax.random.PRNGKey(0)
    ks = jax.random.split(key, 9)
    scale = 1.0 / math.sqrt(C)
    wq = jax.random.uniform(ks[0], (C, C), jnp.float32, -scale, scale)
    bq = jax.random.uniform(ks[1], (1, C), jnp.float32, -scale, scale)
    wk = jax.random.uniform(ks[2], (C, C), jnp.float32, -scale, scale)
    bk = jax.random.uniform(ks[3], (1, C), jnp.float32, -scale, scale)
    wv = jax.random.uniform(ks[4], (C, C), jnp.float32, -scale, scale)
    bv = jax.random.uniform(ks[5], (1, C), jnp.float32, -scale, scale)
    wp = jax.random.uniform(ks[6], (C, C), jnp.float32, -scale, scale)
    bp = jax.random.uniform(ks[7], (1, C), jnp.float32, -scale, scale)
    params = (wq, bq, wk, bk, wv, bv, wp, bp)

    x = jax.random.normal(ks[8], (B, T, C), jnp.float32)

    # Full path (returns attention, like the PyTorch module).
    y, att = causal_self_attention(x, params, n_head, save_attn=True)
    y = jax.block_until_ready(y)
    att = jax.block_until_ready(att)

    # Attention-dump-free path (perf option) must produce the same y.
    y_noatt, _ = causal_self_attention(x, params, n_head, save_attn=False)
    y_noatt = jax.block_until_ready(y_noatt)

    y_ref, att_ref = _reference(x, params, n_head)

    # Tolerance reflects bf16 matmul operands (f32 accumulation); softmax math
    # and all bias adds stay f32 and the divide is exact.
    assert jnp.allclose(y, y_ref, atol=3e-2, rtol=3e-2), "output mismatch"
    assert jnp.allclose(att, att_ref, atol=3e-2, rtol=3e-2), "attention mismatch"
    assert jnp.allclose(y_noatt, y, atol=1e-5, rtol=1e-5), "save_attn=False mismatch"

    print("KERNEL_OK")
</pallas_src>

<mosaic_0001>
module attributes {stable_mosaic.version = 11 : i64} {
  func.func @_causal_attn_kernel(%arg0: i32, %arg1: memref<16x32xf32, #tpu.memory_space<vmem>>, %arg2: memref<32x96xbf16, #tpu.memory_space<vmem>>, %arg3: memref<1x96xf32, #tpu.memory_space<vmem>>, %arg4: memref<32x32xbf16, #tpu.memory_space<vmem>>, %arg5: memref<1x32xf32, #tpu.memory_space<vmem>>, %arg6: memref<16x32xf32, #tpu.memory_space<vmem>>, %arg7: memref<2x8x32xf32, #tpu.memory_space<vmem>>, %arg8: memref<16x96xf32, #tpu.memory_space<vmem>>) attributes {dimension_semantics = [#tpu.dimension_semantics<arbitrary>], iteration_bounds = array<i64: 1>, scalar_prefetch = 0 : i64, scratch_operands = 1 : i64, tpu.core_type = #tpu.core_type<tc>, window_params = [{pipeline_mode = #tpu.pipeline_mode<synchronous>, transform_indices = @transform_0, window_bounds = array<i64: 16, 32>}, {pipeline_mode = #tpu.pipeline_mode<synchronous>, transform_indices = @transform_1, window_bounds = array<i64: 32, 96>}, {pipeline_mode = #tpu.pipeline_mode<synchronous>, transform_indices = @transform_2, window_bounds = array<i64: 1, 96>}, {pipeline_mode = #tpu.pipeline_mode<synchronous>, transform_indices = @transform_3, window_bounds = array<i64: 32, 32>}, {pipeline_mode = #tpu.pipeline_mode<synchronous>, transform_indices = @transform_4, window_bounds = array<i64: 1, 32>}, {pipeline_mode = #tpu.pipeline_mode<synchronous>, transform_indices = @transform_5, window_bounds = array<i64: 16, 32>}, {pipeline_mode = #tpu.pipeline_mode<synchronous>, transform_indices = @transform_6, window_bounds = array<i64: 2, 8, 32>}]} {
    %c0 = arith.constant 0 : index
    %c0_0 = arith.constant 0 : index
    %0 = vector.load %arg1[%c0, %c0_0] : memref<16x32xf32, #tpu.memory_space<vmem>>, vector<16x32xf32>
    %1 = arith.truncf %0 : vector<16x32xf32> to vector<16x32xbf16>
    %c0_1 = arith.constant 0 : index
    %c0_2 = arith.constant 0 : index
    %2 = vector.load %arg2[%c0_1, %c0_2] : memref<32x96xbf16, #tpu.memory_space<vmem>>, vector<32x96xbf16>
    %cst = arith.constant dense<0.000000e+00> : vector<16x96xf32>
    %3 = tpu.matmul %1, %2, %cst {dimension_numbers = #tpu.dot_dimension_numbers<[1], [0], [0], [1], [0, 0, 1, 1], [], []>} : vector<16x32xbf16>, vector<32x96xbf16>, vector<16x96xf32> -> vector<16x96xf32>
    %c0_3 = arith.constant 0 : index
    %c0_4 = arith.constant 0 : index
    %4 = vector.load %arg3[%c0_3, %c0_4] : memref<1x96xf32, #tpu.memory_space<vmem>>, vector<1x96xf32>
    %5 = vector.broadcast %4 : vector<1x96xf32> to vector<16x96xf32>
    %6 = arith.addf %3, %5 : vector<16x96xf32>
    %c0_5 = arith.constant 0 : index
    %c0_6 = arith.constant 0 : index
    %7 = vector.load %arg8[%c0_5, %c0_6] : memref<16x96xf32, #tpu.memory_space<vmem>>, vector<16x96xf32>
    tpu.vector_store %arg8[%c0_5, %c0_6], %6 {strides = array<i32>} : memref<16x96xf32, #tpu.memory_space<vmem>>, vector<16x96xf32>,
    %8 = tpu.iota {dimensions = array<i32: 0>} : vector<8x8xi32>
    %9 = tpu.iota {dimensions = array<i32: 1>} : vector<8x8xi32>
    %10 = arith.cmpi sge, %8, %9 : vector<8x8xi32>
    %cst_7 = arith.constant 0.000000e+00 : f32
    %cst_8 = arith.constant -1.000000e+30 : f32
    %11 = vector.broadcast %cst_7 : f32 to vector<8x8xf32>
    %12 = vector.broadcast %cst_8 : f32 to vector<8x8xf32>
    %13 = arith.select %10, %11, %12 : vector<8x8xi1>, vector<8x8xf32>
    %c0_9 = arith.constant 0 : index
    %c0_10 = arith.constant 0 : index
    %14 = vector.load %arg4[%c0_9, %c0_10] : memref<32x32xbf16, #tpu.memory_space<vmem>>, vector<32x32xbf16>
    %c0_11 = arith.constant 0 : index
    %c0_12 = arith.constant 0 : index
    %15 = vector.load %arg5[%c0_11, %c0_12] : memref<1x32xf32, #tpu.memory_space<vmem>>, vector<1x32xf32>
    %c0_13 = arith.constant 0 : index
    %c0_14 = arith.constant 0 : index
    %16 = vector.load %arg8[%c0_13, %c0_14] : memref<16x96xf32, #tpu.memory_space<vmem>>, vector<8x8xf32>
    %17 = arith.truncf %16 : vector<8x8xf32> to vector<8x8xbf16>
    %c0_15 = arith.constant 0 : index
    %c32 = arith.constant 32 : index
    %18 = vector.load %arg8[%c0_15, %c32] : memref<16x96xf32, #tpu.memory_space<vmem>>, vector<8x8xf32>
    %19 = arith.truncf %18 : vector<8x8xf32> to vector<8x8xbf16>
    %c0_16 = arith.constant 0 : index
    %c64 = arith.constant 64 : index
    %20 = vector.load %arg8[%c0_16, %c64] : memref<16x96xf32, #tpu.memory_space<vmem>>, vector<8x8xf32>
    %21 = arith.truncf %20 : vector<8x8xf32> to vector<8x8xbf16>
    %cst_17 = arith.constant dense<0.000000e+00> : vector<8x8xf32>
    %22 = tpu.matmul %17, %19, %cst_17 {dimension_numbers = #tpu.dot_dimension_numbers<[1], [1], [0], [0], [0, 0, 1, 0], [], []>} : vector<8x8xbf16>, vector<8x8xbf16>, vector<8x8xf32> -> vector<8x8xf32>
    %23 = arith.addf %22, %13 : vector<8x8xf32>
    %cst_18 = arith.constant dense<0xFF800000> : vector<8xf32>
    %24 = vector.multi_reduction <maximumf>, %23, %cst_18 [1] : vector<8x8xf32> to vector<8xf32>
    %25 = vector.shape_cast %24 : vector<8xf32> to vector<8x1xf32>
    %26 = vector.broadcast %25 : vector<8x1xf32> to vector<8x8xf32>
    %27 = arith.subf %23, %26 : vector<8x8xf32>
    %28 = math.exp %27 : vector<8x8xf32>
    %cst_19 = arith.constant dense<0.000000e+00> : vector<8xf32>
    %29 = vector.multi_reduction <add>, %28, %cst_19 [1] : vector<8x8xf32> to vector<8xf32>
    %30 = vector.shape_cast %29 : vector<8xf32> to vector<8x1xf32>
    %31 = vector.broadcast %30 : vector<8x1xf32> to vector<8x8xf32>
    %32 = arith.divf %28, %31 : vector<8x8xf32>
    %33 = arith.truncf %32 : vector<8x8xf32> to vector<8x8xbf16>
    %cst_20 = arith.constant dense<0.000000e+00> : vector<8x8xf32>
    %34 = tpu.matmul %33, %21, %cst_20 {dimension_numbers = #tpu.dot_dimension_numbers<[1], [0], [0], [1], [0, 0, 1, 1], [], []>} : vector<8x8xbf16>, vector<8x8xbf16>, vector<8x8xf32> -> vector<8x8xf32>
    %c0_21 = arith.constant 0 : index
    %c8 = arith.constant 8 : index
    %35 = vector.load %arg8[%c0_21, %c8] : memref<16x96xf32, #tpu.memory_space<vmem>>, vector<8x8xf32>
    %36 = arith.truncf %35 : vector<8x8xf32> to vector<8x8xbf16>
    %c0_22 = arith.constant 0 : index
    %c40 = arith.constant 40 : index
    %37 = vector.load %arg8[%c0_22, %c40] : memref<16x96xf32, #tpu.memory_space<vmem>>, vector<8x8xf32>
    %38 = arith.truncf %37 : vector<8x8xf32> to vector<8x8xbf16>
    %c0_23 = arith.constant 0 : index
    %c72 = arith.constant 72 : index
    %39 = vector.load %arg8[%c0_23, %c72] : memref<16x96xf32, #tpu.memory_space<vmem>>, vector<8x8xf32>
    %40 = arith.truncf %39 : vector<8x8xf32> to vector<8x8xbf16>
    %cst_24 = arith.constant dense<0.000000e+00> : vector<8x8xf32>
    %41 = tpu.matmul %36, %38, %cst_24 {dimension_numbers = #tpu.dot_dimension_numbers<[1], [1], [0], [0], [0, 0, 1, 0], [], []>} : vector<8x8xbf16>, vector<8x8xbf16>, vector<8x8xf32> -> vector<8x8xf32>
    %42 = arith.addf %41, %13 : vector<8x8xf32>
    %cst_25 = arith.constant dense<0xFF800000> : vector<8xf32>
    %43 = vector.multi_reduction <maximumf>, %42, %cst_25 [1] : vector<8x8xf32> to vector<8xf32>
    %44 = vector.shape_cast %43 : vector<8xf32> to vector<8x1xf32>
    %45 = vector.broadcast %44 : vector<8x1xf32> to vector<8x8xf32>
    %46 = arith.subf %42, %45 : vector<8x8xf32>
    %47 = math.exp %46 : vector<8x8xf32>
    %cst_26 = arith.constant dense<0.000000e+00> : vector<8xf32>
    %48 = vector.multi_reduction <add>, %47, %cst_26 [1] : vector<8x8xf32> to vector<8xf32>
    %49 = vector.shape_cast %48 : vector<8xf32> to vector<8x1xf32>
    %50 = vector.broadcast %49 : vector<8x1xf32> to vector<8x8xf32>
    %51 = arith.divf %47, %50 : vector<8x8xf32>
    %52 = arith.truncf %51 : vector<8x8xf32> to vector<8x8xbf16>
    %cst_27 = arith.constant dense<0.000000e+00> : vector<8x8xf32>
    %53 = tpu.matmul %52, %40, %cst_27 {dimension_numbers = #tpu.dot_dimension_numbers<[1], [0], [0], [1], [0, 0, 1, 1], [], []>} : vector<8x8xbf16>, vector<8x8xbf16>, vector<8x8xf32> -> vector<8x8xf32>
    %c0_28 = arith.constant 0 : index
    %c16 = arith.constant 16 : index
    %54 = vector.load %arg8[%c0_28, %c16] : memref<16x96xf32, #tpu.memory_space<vmem>>, vector<8x8xf32>
    %55 = arith.truncf %54 : vector<8x8xf32> to vector<8x8xbf16>
    %c0_29 = arith.constant 0 : index
    %c48 = arith.constant 48 : index
    %56 = vector.load %arg8[%c0_29, %c48] : memref<16x96xf32, #tpu.memory_space<vmem>>, vector<8x8xf32>
    %57 = arith.truncf %56 : vector<8x8xf32> to vector<8x8xbf16>
    %c0_30 = arith.constant 0 : index
    %c80 = arith.constant 80 : index
    %58 = vector.load %arg8[%c0_30, %c80] : memref<16x96xf32, #tpu.memory_space<vmem>>, vector<8x8xf32>
    %59 = arith.truncf %58 : vector<8x8xf32> to vector<8x8xbf16>
    %cst_31 = arith.constant dense<0.000000e+00> : vector<8x8xf32>
    %60 = tpu.matmul %55, %57, %cst_31 {dimension_numbers = #tpu.dot_dimension_numbers<[1], [1], [0], [0], [0, 0, 1, 0], [], []>} : vector<8x8xbf16>, vector<8x8xbf16>, vector<8x8xf32> -> vector<8x8xf32>
    %61 = arith.addf %60, %13 : vector<8x8xf32>
    %cst_32 = arith.constant dense<0xFF800000> : vector<8xf32>
    %62 = vector.multi_reduction <maximumf>, %61, %cst_32 [1] : vector<8x8xf32> to vector<8xf32>
    %63 = vector.shape_cast %62 : vector<8xf32> to vector<8x1xf32>
    %64 = vector.broadcast %63 : vector<8x1xf32> to vector<8x8xf32>
    %65 = arith.subf %61, %64 : vector<8x8xf32>
    %66 = math.exp %65 : vector<8x8xf32>
    %cst_33 = arith.constant dense<0.000000e+00> : vector<8xf32>
    %67 = vector.multi_reduction <add>, %66, %cst_33 [1] : vector<8x8xf32> to vector<8xf32>
    %68 = vector.shape_cast %67 : vector<8xf32> to vector<8x1xf32>
    %69 = vector.broadcast %68 : vector<8x1xf32> to vector<8x8xf32>
    %70 = arith.divf %66, %69 : vector<8x8xf32>
    %71 = arith.truncf %70 : vector<8x8xf32> to vector<8x8xbf16>
    %cst_34 = arith.constant dense<0.000000e+00> : vector<8x8xf32>
    %72 = tpu.matmul %71, %59, %cst_34 {dimension_numbers = #tpu.dot_dimension_numbers<[1], [0], [0], [1], [0, 0, 1, 1], [], []>} : vector<8x8xbf16>, vector<8x8xbf16>, vector<8x8xf32> -> vector<8x8xf32>
    %c0_35 = arith.constant 0 : index
    %c24 = arith.constant 24 : index
    %73 = vector.load %arg8[%c0_35, %c24] : memref<16x96xf32, #tpu.memory_space<vmem>>, vector<8x8xf32>
    %74 = arith.truncf %73 : vector<8x8xf32> to vector<8x8xbf16>
    %c0_36 = arith.constant 0 : index
    %c56 = arith.constant 56 : index
    %75 = vector.load %arg8[%c0_36, %c56] : memref<16x96xf32, #tpu.memory_space<vmem>>, vector<8x8xf32>
    %76 = arith.truncf %75 : vector<8x8xf32> to vector<8x8xbf16>
    %c0_37 = arith.constant 0 : index
    %c88 = arith.constant 88 : index
    %77 = vector.load %arg8[%c0_37, %c88] : memref<16x96xf32, #tpu.memory_space<vmem>>, vector<8x8xf32>
    %78 = arith.truncf %77 : vector<8x8xf32> to vector<8x8xbf16>
    %cst_38 = arith.constant dense<0.000000e+00> : vector<8x8xf32>
    %79 = tpu.matmul %74, %76, %cst_38 {dimension_numbers = #tpu.dot_dimension_numbers<[1], [1], [0], [0], [0, 0, 1, 0], [], []>} : vector<8x8xbf16>, vector<8x8xbf16>, vector<8x8xf32> -> vector<8x8xf32>
    %80 = arith.addf %79, %13 : vector<8x8xf32>
    %cst_39 = arith.constant dense<0xFF800000> : vector<8xf32>
    %81 = vector.multi_reduction <maximumf>, %80, %cst_39 [1] : vector<8x8xf32> to vector<8xf32>
    %82 = vector.shape_cast %81 : vector<8xf32> to vector<8x1xf32>
    %83 = vector.broadcast %82 : vector<8x1xf32> to vector<8x8xf32>
    %84 = arith.subf %80, %83 : vector<8x8xf32>
    %85 = math.exp %84 : vector<8x8xf32>
    %cst_40 = arith.constant dense<0.000000e+00> : vector<8xf32>
    %86 = vector.multi_reduction <add>, %85, %cst_40 [1] : vector<8x8xf32> to vector<8xf32>
    %87 = vector.shape_cast %86 : vector<8xf32> to vector<8x1xf32>
    %88 = vector.broadcast %87 : vector<8x1xf32> to vector<8x8xf32>
    %89 = arith.divf %85, %88 : vector<8x8xf32>
    %90 = arith.truncf %89 : vector<8x8xf32> to vector<8x8xbf16>
    %cst_41 = arith.constant dense<0.000000e+00> : vector<8x8xf32>
    %91 = tpu.matmul %90, %78, %cst_41 {dimension_numbers = #tpu.dot_dimension_numbers<[1], [0], [0], [1], [0, 0, 1, 1], [], []>} : vector<8x8xbf16>, vector<8x8xbf16>, vector<8x8xf32> -> vector<8x8xf32>
    %92 = tpu.concatenate %34, %53, %72, %91 in 1 : vector<8x8xf32>, vector<8x8xf32>, vector<8x8xf32>, vector<8x8xf32> -> vector<8x32xf32>
    %93 = tpu.concatenate %32, %51, %70, %89 in 1 : vector<8x8xf32>, vector<8x8xf32>, vector<8x8xf32>, vector<8x8xf32> -> vector<8x32xf32>
    %c0_42 = arith.constant 0 : index
    %c0_43 = arith.constant 0 : index
    %c0_44 = arith.constant 0 : index
    %94 = vector.load %arg7[%c0_42, %c0_43, %c0_44] : memref<2x8x32xf32, #tpu.memory_space<vmem>>, vector<1x8x32xf32>
    %95 = vector.shape_cast %94 : vector<1x8x32xf32> to vector<8x32xf32>
    %96 = vector.shape_cast %93 : vector<8x32xf32> to vector<1x8x32xf32>
    tpu.vector_store %arg7[%c0_42, %c0_43, %c0_44], %96 {strides = array<i32>} : memref<2x8x32xf32, #tpu.memory_space<vmem>>, vector<1x8x32xf32>,
    %c8_45 = arith.constant 8 : index
    %c0_46 = arith.constant 0 : index
    %97 = vector.load %arg8[%c8_45, %c0_46] : memref<16x96xf32, #tpu.memory_space<vmem>>, vector<8x8xf32>
    %98 = arith.truncf %97 : vector<8x8xf32> to vector<8x8xbf16>
    %c8_47 = arith.constant 8 : index
    %c32_48 = arith.constant 32 : index
    %99 = vector.load %arg8[%c8_47, %c32_48] : memref<16x96xf32, #tpu.memory_space<vmem>>, vector<8x8xf32>
    %100 = arith.truncf %99 : vector<8x8xf32> to vector<8x8xbf16>
    %c8_49 = arith.constant 8 : index
    %c64_50 = arith.constant 64 : index
    %101 = vector.load %arg8[%c8_49, %c64_50] : memref<16x96xf32, #tpu.memory_space<vmem>>, vector<8x8xf32>
    %102 = arith.truncf %101 : vector<8x8xf32> to vector<8x8xbf16>
    %cst_51 = arith.constant dense<0.000000e+00> : vector<8x8xf32>
    %103 = tpu.matmul %98, %100, %cst_51 {dimension_numbers = #tpu.dot_dimension_numbers<[1], [1], [0], [0], [0, 0, 1, 0], [], []>} : vector<8x8xbf16>, vector<8x8xbf16>, vector<8x8xf32> -> vector<8x8xf32>
    %104 = arith.addf %103, %13 : vector<8x8xf32>
    %cst_52 = arith.constant dense<0xFF800000> : vector<8xf32>
    %105 = vector.multi_reduction <maximumf>, %104, %cst_52 [1] : vector<8x8xf32> to vector<8xf32>
    %106 = vector.shape_cast %105 : vector<8xf32> to vector<8x1xf32>
    %107 = vector.broadcast %106 : vector<8x1xf32> to vector<8x8xf32>
    %108 = arith.subf %104, %107 : vector<8x8xf32>
    %109 = math.exp %108 : vector<8x8xf32>
    %cst_53 = arith.constant dense<0.000000e+00> : vector<8xf32>
    %110 = vector.multi_reduction <add>, %109, %cst_53 [1] : vector<8x8xf32> to vector<8xf32>
    %111 = vector.shape_cast %110 : vector<8xf32> to vector<8x1xf32>
    %112 = vector.broadcast %111 : vector<8x1xf32> to vector<8x8xf32>
    %113 = arith.divf %109, %112 : vector<8x8xf32>
    %114 = arith.truncf %113 : vector<8x8xf32> to vector<8x8xbf16>
    %cst_54 = arith.constant dense<0.000000e+00> : vector<8x8xf32>
    %115 = tpu.matmul %114, %102, %cst_54 {dimension_numbers = #tpu.dot_dimension_numbers<[1], [0], [0], [1], [0, 0, 1, 1], [], []>} : vector<8x8xbf16>, vector<8x8xbf16>, vector<8x8xf32> -> vector<8x8xf32>
    %c8_55 = arith.constant 8 : index
    %c8_56 = arith.constant 8 : index
    %116 = vector.load %arg8[%c8_55, %c8_56] : memref<16x96xf32, #tpu.memory_space<vmem>>, vector<8x8xf32>
    %117 = arith.truncf %116 : vector<8x8xf32> to vector<8x8xbf16>
    %c8_57 = arith.constant 8 : index
    %c40_58 = arith.constant 40 : index
    %118 = vector.load %arg8[%c8_57, %c40_58] : memref<16x96xf32, #tpu.memory_space<vmem>>, vector<8x8xf32>
    %119 = arith.truncf %118 : vector<8x8xf32> to vector<8x8xbf16>
    %c8_59 = arith.constant 8 : index
    %c72_60 = arith.constant 72 : index
    %120 = vector.load %arg8[%c8_59, %c72_60] : memref<16x96xf32, #tpu.memory_space<vmem>>, vector<8x8xf32>
    %121 = arith.truncf %120 : vector<8x8xf32> to vector<8x8xbf16>
    %cst_61 = arith.constant dense<0.000000e+00> : vector<8x8xf32>
    %122 = tpu.matmul %117, %119, %cst_61 {dimension_numbers = #tpu.dot_dimension_numbers<[1], [1], [0], [0], [0, 0, 1, 0], [], []>} : vector<8x8xbf16>, vector<8x8xbf16>, vector<8x8xf32> -> vector<8x8xf32>
    %123 = arith.addf %122, %13 : vector<8x8xf32>
    %cst_62 = arith.constant dense<0xFF800000> : vector<8xf32>
    %124 = vector.multi_reduction <maximumf>, %123, %cst_62 [1] : vector<8x8xf32> to vector<8xf32>
    %125 = vector.shape_cast %124 : vector<8xf32> to vector<8x1xf32>
    %126 = vector.broadcast %125 : vector<8x1xf32> to vector<8x8xf32>
    %127 = arith.subf %123, %126 : vector<8x8xf32>
    %128 = math.exp %127 : vector<8x8xf32>
    %cst_63 = arith.constant dense<0.000000e+00> : vector<8xf32>
    %129 = vector.multi_reduction <add>, %128, %cst_63 [1] : vector<8x8xf32> to vector<8xf32>
    %130 = vector.shape_cast %129 : vector<8xf32> to vector<8x1xf32>
    %131 = vector.broadcast %130 : vector<8x1xf32> to vector<8x8xf32>
    %132 = arith.divf %128, %131 : vector<8x8xf32>
    %133 = arith.truncf %132 : vector<8x8xf32> to vector<8x8xbf16>
    %cst_64 = arith.constant dense<0.000000e+00> : vector<8x8xf32>
    %134 = tpu.matmul %133, %121, %cst_64 {dimension_numbers = #tpu.dot_dimension_numbers<[1], [0], [0], [1], [0, 0, 1, 1], [], []>} : vector<8x8xbf16>, vector<8x8xbf16>, vector<8x8xf32> -> vector<8x8xf32>
    %c8_65 = arith.constant 8 : index
    %c16_66 = arith.constant 16 : index
    %135 = vector.load %arg8[%c8_65, %c16_66] : memref<16x96xf32, #tpu.memory_space<vmem>>, vector<8x8xf32>
    %136 = arith.truncf %135 : vector<8x8xf32> to vector<8x8xbf16>
    %c8_67 = arith.constant 8 : index
    %c48_68 = arith.constant 48 : index
    %137 = vector.load %arg8[%c8_67, %c48_68] : memref<16x96xf32, #tpu.memory_space<vmem>>, vector<8x8xf32>
    %138 = arith.truncf %137 : vector<8x8xf32> to vector<8x8xbf16>
    %c8_69 = arith.constant 8 : index
    %c80_70 = arith.constant 80 : index
    %139 = vector.load %arg8[%c8_69, %c80_70] : memref<16x96xf32, #tpu.memory_space<vmem>>, vector<8x8xf32>
    %140 = arith.truncf %139 : vector<8x8xf32> to vector<8x8xbf16>
    %cst_71 = arith.constant dense<0.000000e+00> : vector<8x8xf32>
    %141 = tpu.matmul %136, %138, %cst_71 {dimension_numbers = #tpu.dot_dimension_numbers<[1], [1], [0], [0], [0, 0, 1, 0], [], []>} : vector<8x8xbf16>, vector<8x8xbf16>, vector<8x8xf32> -> vector<8x8xf32>
    %142 = arith.addf %141, %13 : vector<8x8xf32>
    %cst_72 = arith.constant dense<0xFF800000> : vector<8xf32>
    %143 = vector.multi_reduction <maximumf>, %142, %cst_72 [1] : vector<8x8xf32> to vector<8xf32>
    %144 = vector.shape_cast %143 : vector<8xf32> to vector<8x1xf32>
    %145 = vector.broadcast %144 : vector<8x1xf32> to vector<8x8xf32>
    %146 = arith.subf %142, %145 : vector<8x8xf32>
    %147 = math.exp %146 : vector<8x8xf32>
    %cst_73 = arith.constant dense<0.000000e+00> : vector<8xf32>
    %148 = vector.multi_reduction <add>, %147, %cst_73 [1] : vector<8x8xf32> to vector<8xf32>
    %149 = vector.shape_cast %148 : vector<8xf32> to vector<8x1xf32>
    %150 = vector.broadcast %149 : vector<8x1xf32> to vector<8x8xf32>
    %151 = arith.divf %147, %150 : vector<8x8xf32>
    %152 = arith.truncf %151 : vector<8x8xf32> to vector<8x8xbf16>
    %cst_74 = arith.constant dense<0.000000e+00> : vector<8x8xf32>
    %153 = tpu.matmul %152, %140, %cst_74 {dimension_numbers = #tpu.dot_dimension_numbers<[1], [0], [0], [1], [0, 0, 1, 1], [], []>} : vector<8x8xbf16>, vector<8x8xbf16>, vector<8x8xf32> -> vector<8x8xf32>
    %c8_75 = arith.constant 8 : index
    %c24_76 = arith.constant 24 : index
    %154 = vector.load %arg8[%c8_75, %c24_76] : memref<16x96xf32, #tpu.memory_space<vmem>>, vector<8x8xf32>
    %155 = arith.truncf %154 : vector<8x8xf32> to vector<8x8xbf16>
    %c8_77 = arith.constant 8 : index
    %c56_78 = arith.constant 56 : index
    %156 = vector.load %arg8[%c8_77, %c56_78] : memref<16x96xf32, #tpu.memory_space<vmem>>, vector<8x8xf32>
    %157 = arith.truncf %156 : vector<8x8xf32> to vector<8x8xbf16>
    %c8_79 = arith.constant 8 : index
    %c88_80 = arith.constant 88 : index
    %158 = vector.load %arg8[%c8_79, %c88_80] : memref<16x96xf32, #tpu.memory_space<vmem>>, vector<8x8xf32>
    %159 = arith.truncf %158 : vector<8x8xf32> to vector<8x8xbf16>
    %cst_81 = arith.constant dense<0.000000e+00> : vector<8x8xf32>
    %160 = tpu.matmul %155, %157, %cst_81 {dimension_numbers = #tpu.dot_dimension_numbers<[1], [1], [0], [0], [0, 0, 1, 0], [], []>} : vector<8x8xbf16>, vector<8x8xbf16>, vector<8x8xf32> -> vector<8x8xf32>
    %161 = arith.addf %160, %13 : vector<8x8xf32>
    %cst_82 = arith.constant dense<0xFF800000> : vector<8xf32>
    %162 = vector.multi_reduction <maximumf>, %161, %cst_82 [1] : vector<8x8xf32> to vector<8xf32>
    %163 = vector.shape_cast %162 : vector<8xf32> to vector<8x1xf32>
    %164 = vector.broadcast %163 : vector<8x1xf32> to vector<8x8xf32>
    %165 = arith.subf %161, %164 : vector<8x8xf32>
    %166 = math.exp %165 : vector<8x8xf32>
    %cst_83 = arith.constant dense<0.000000e+00> : vector<8xf32>
    %167 = vector.multi_reduction <add>, %166, %cst_83 [1] : vector<8x8xf32> to vector<8xf32>
    %168 = vector.shape_cast %167 : vector<8xf32> to vector<8x1xf32>
    %169 = vector.broadcast %168 : vector<8x1xf32> to vector<8x8xf32>
    %170 = arith.divf %166, %169 : vector<8x8xf32>
    %171 = arith.truncf %170 : vector<8x8xf32> to vector<8x8xbf16>
    %cst_84 = arith.constant dense<0.000000e+00> : vector<8x8xf32>
    %172 = tpu.matmul %171, %159, %cst_84 {dimension_numbers = #tpu.dot_dimension_numbers<[1], [0], [0], [1], [0, 0, 1, 1], [], []>} : vector<8x8xbf16>, vector<8x8xbf16>, vector<8x8xf32> -> vector<8x8xf32>
    %173 = tpu.concatenate %115, %134, %153, %172 in 1 : vector<8x8xf32>, vector<8x8xf32>, vector<8x8xf32>, vector<8x8xf32> -> vector<8x32xf32>
    %174 = tpu.concatenate %113, %132, %151, %170 in 1 : vector<8x8xf32>, vector<8x8xf32>, vector<8x8xf32>, vector<8x8xf32> -> vector<8x32xf32>
    %c1 = arith.constant 1 : index
    %c0_85 = arith.constant 0 : index
    %c0_86 = arith.constant 0 : index
    %175 = vector.load %arg7[%c1, %c0_85, %c0_86] : memref<2x8x32xf32, #tpu.memory_space<vmem>>, vector<1x8x32xf32>
    %176 = vector.shape_cast %175 : vector<1x8x32xf32> to vector<8x32xf32>
    %177 = vector.shape_cast %174 : vector<8x32xf32> to vector<1x8x32xf32>
    tpu.vector_store %arg7[%c1, %c0_85, %c0_86], %177 {strides = array<i32>} : memref<2x8x32xf32, #tpu.memory_space<vmem>>, vector<1x8x32xf32>,
    %178 = tpu.concatenate %92, %173 in 0 : vector<8x32xf32>, vector<8x32xf32> -> vector<16x32xf32>
    %179 = arith.truncf %178 : vector<16x32xf32> to vector<16x32xbf16>
    %cst_87 = arith.constant dense<0.000000e+00> : vector<16x32xf32>
    %180 = tpu.matmul %179, %14, %cst_87 {dimension_numbers = #tpu.dot_dimension_numbers<[1], [0], [0], [1], [0, 0, 1, 1], [], []>} : vector<16x32xbf16>, vector<32x32xbf16>, vector<16x32xf32> -> vector<16x32xf32>
    %181 = vector.broadcast %15 : vector<1x32xf32> to vector<16x32xf32>
    %182 = arith.addf %180, %181 : vector<16x32xf32>
    %c0_88 = arith.constant 0 : index
    %c0_89 = arith.constant 0 : index
    %183 = vector.load %arg6[%c0_88, %c0_89] : memref<16x32xf32, #tpu.memory_space<vmem>>, vector<16x32xf32>
    tpu.vector_store %arg6[%c0_88, %c0_89], %182 {strides = array<i32>} : memref<16x32xf32, #tpu.memory_space<vmem>>, vector<16x32xf32>,
    return
  }
  func.func @transform_0(%arg0: i32) -> (i32, i32) {
    %c0_i32 = arith.constant 0 : i32
    %c0_i32_0 = arith.constant 0 : i32
    %c0_i32_1 = arith.constant 0 : i32
    return %c0_i32, %c0_i32_0 : i32, i32
  }
  func.func @transform_1(%arg0: i32) -> (i32, i32) {
    %c0_i32 = arith.constant 0 : i32
    %c0_i32_0 = arith.constant 0 : i32
    %c0_i32_1 = arith.constant 0 : i32
    return %c0_i32, %c0_i32_0 : i32, i32
  }
  func.func @transform_2(%arg0: i32) -> (i32, i32) {
    %c0_i32 = arith.constant 0 : i32
    %c0_i32_0 = arith.constant 0 : i32
    %c0_i32_1 = arith.constant 0 : i32
    return %c0_i32, %c0_i32_0 : i32, i32
  }
  func.func @transform_3(%arg0: i32) -> (i32, i32) {
    %c0_i32 = arith.constant 0 : i32
    %c0_i32_0 = arith.constant 0 : i32
    %c0_i32_1 = arith.constant 0 : i32
    return %c0_i32, %c0_i32_0 : i32, i32
  }
  func.func @transform_4(%arg0: i32) -> (i32, i32) {
    %c0_i32 = arith.constant 0 : i32
    %c0_i32_0 = arith.constant 0 : i32
    %c0_i32_1 = arith.constant 0 : i32
    return %c0_i32, %c0_i32_0 : i32, i32
  }
  func.func @transform_5(%arg0: i32) -> (i32, i32) {
    %c0_i32 = arith.constant 0 : i32
    %c0_i32_0 = arith.constant 0 : i32
    %c0_i32_1 = arith.constant 0 : i32
    return %c0_i32, %c0_i32_0 : i32, i32
  }
  func.func @transform_6(%arg0: i32) -> (i32, i32, i32) {
    %c0_i32 = arith.constant 0 : i32
    %c0_i32_0 = arith.constant 0 : i32
    %c0_i32_1 = arith.constant 0 : i32
    %c0_i32_2 = arith.constant 0 : i32
    return %c0_i32, %c0_i32_0, %c0_i32_1 : i32, i32, i32
  }
}

</mosaic_0001>

<llo_original>
// kernel: tpu_custom_call.1
$region0: #{tpu_custom_call.1}
  #allocation0 [shape = 'u32[]', space=smem, size = 0x4, offset = 0x4, fixed_abs, tag = 'smem constant byte address 0x4 - core index']
  #allocation1 [shape = 'u32[144,128]{1,0:T(1,128)}', space=vmem, size = 0x12000, scoped, tag = 'internal scratch']
  #allocation2 [shape = 'f32[16,96]{1,0:T(8,128)}', space=vmem, size = 0x2000, scoped, tag = 'scratch operand']
  %s0 = inlined_call_operand.hbm [shape: f32[16,32], index: 0, kind: input, shape index: {}]
  %s1 = inlined_call_operand.hbm [shape: bf16[32,96], index: 1, kind: input, shape index: {}]
  %s2 = inlined_call_operand.vmem [shape: f32[1,96], index: 2, kind: input, shape index: {}]
  %s3 = inlined_call_operand.hbm [shape: bf16[32,32], index: 3, kind: input, shape index: {}]
  %s4 = inlined_call_operand.vmem [shape: f32[1,32], index: 4, kind: input, shape index: {}]
  %s5 = inlined_call_operand.hbm [shape: f32[16,32], index: 5, kind: output, shape index: {0}]
  %s6 = inlined_call_operand.hbm [shape: f32[2,8,32], index: 6, kind: output, shape index: {1}]
  %7 = xla_tuple %s5, %s6
  %s8 = sld [smem:[#allocation0]]
  $region50: #{tpu_custom_call.1} parent=0
    _
  %s10 = ssub.s32 1, %s8
  %s11 = scalar_select 0, %s10, %s8
  $region1: #{tpu_custom_call.1} parent=0
    #allocation3 [shape = 'u8[8192]{0}', space=vmem, size = 0x2000, scoped, tag = 'input window, operand 0, single buffered']
    #allocation4 [shape = 's32[1]{0}', space=sflag, size = 0x4, scoped, tag = 'scoped memory for tpu_custom_call.1']
    #allocation5 [shape = 's32[1]{0}', space=sflag, size = 0x4, scoped, tag = 'scoped memory for tpu_custom_call.1']
    #allocation6 [shape = 'u8[8192]{0}', space=vmem, size = 0x2000, scoped, tag = 'input window, operand 1, single buffered']
    #allocation7 [shape = 's32[1]{0}', space=sflag, size = 0x4, scoped, tag = 'scoped memory for tpu_custom_call.1']
    #allocation8 [shape = 'u8[8192]{0}', space=vmem, size = 0x2000, scoped, tag = 'input window, operand 3, single buffered']
    #allocation9 [shape = 'u8[8192]{0}', space=vmem, size = 0x2000, scoped, tag = 'output window, operand 0, single buffered']
    #allocation10 [shape = 'u8[8192]{0}', space=vmem, size = 0x2000, scoped, tag = 'output window, operand 1, single buffered']
    #allocation11 [shape = 's32[1]{0}', space=sflag, size = 0x4, scoped, tag = 'scoped memory for tpu_custom_call.1']
    %12 = vsyncpa [#allocation4], 0
    %13 = vsyncpa [#allocation7], 0
    %14 = vsyncpa [#allocation5], 0
    %15 = vsyncpa [#allocation11], 0
    // Predicated region
    $region2: #{tpu_custom_call.1} parent=1 // pred_check
      _
    $region3: #{tpu_custom_call.1} parent=1 // pred_check_branch
      %17 = sbr.rel (0) target = $region5
    $region4: #{tpu_custom_call.1} parent=1 // pred_region
      %s19 = ssub.s32 256, 256
      %20 = vsyncadd [#allocation4], %s19
      %s21 = sshll.u32 [#allocation3], 4
      %s22 = int_to_ptr.vmem [resolvable:$true] %s21
      %27 = dma.hbm_to_vmem [thread:$0]  %s0, 256, %s22, [#allocation4], 128, 128, 8
    $region5: #{tpu_custom_call.1} parent=1 // pred_fallthru
      _
    // Predicated region
    $region6: #{tpu_custom_call.1} parent=1 // pred_check
      _
    $region7: #{tpu_custom_call.1} parent=1 // pred_check_branch
      %29 = sbr.rel (0) target = $region9
    $region8: #{tpu_custom_call.1} parent=1 // pred_region
      %s31 = ssub.s32 256, 256
      %32 = vsyncadd [#allocation7], %s31
      %s33 = sshll.u32 [#allocation6], 4
      %s34 = int_to_ptr.vmem [resolvable:$true] %s33
      %39 = dma.hbm_to_vmem [thread:$0]  %s1, 256, %s34, [#allocation7], 64, 64, 4
    $region9: #{tpu_custom_call.1} parent=1 // pred_fallthru
      _
    // Predicated region
    $region10: #{tpu_custom_call.1} parent=1 // pred_check
      _
    $region11: #{tpu_custom_call.1} parent=1 // pred_check_branch
      %41 = sbr.rel (0) target = $region13
    $region12: #{tpu_custom_call.1} parent=1 // pred_region
      _
    $region13: #{tpu_custom_call.1} parent=1 // pred_fallthru
      _
    // Predicated region
    $region14: #{tpu_custom_call.1} parent=1 // pred_check
      _
    $region15: #{tpu_custom_call.1} parent=1 // pred_check_branch
      %43 = sbr.rel (0) target = $region17
    $region16: #{tpu_custom_call.1} parent=1 // pred_region
      %s45 = ssub.s32 256, 256
      %46 = vsyncadd [#allocation7], %s45
      %s47 = sshll.u32 [#allocation8], 4
      %s48 = int_to_ptr.vmem [resolvable:$true] %s47
      %53 = dma.hbm_to_vmem [thread:$0]  %s3, 256, %s48, [#allocation7], 64, 64, 4
    $region17: #{tpu_custom_call.1} parent=1 // pred_fallthru
      _
    // Predicated region
    $region18: #{tpu_custom_call.1} parent=1 // pred_check
      _
    $region19: #{tpu_custom_call.1} parent=1 // pred_check_branch
      %55 = sbr.rel (0) target = $region21
    $region20: #{tpu_custom_call.1} parent=1 // pred_region
      _
    $region21: #{tpu_custom_call.1} parent=1 // pred_fallthru
      _
    // Predicated region
    $region22: #{tpu_custom_call.1} parent=1 // pred_check
      _
    $region23: #{tpu_custom_call.1} parent=1 // pred_check_branch
      %57 = sbr.rel (0) target = $region25
    $region24: #{tpu_custom_call.1} parent=1 // pred_region
      %58 = dma.done [#allocation4], 256
    $region25: #{tpu_custom_call.1} parent=1 // pred_fallthru
      _
    // Predicated region
    $region26: #{tpu_custom_call.1} parent=1 // pred_check
      _
    $region27: #{tpu_custom_call.1} parent=1 // pred_check_branch
      %60 = sbr.rel (0) target = $region29
    $region28: #{tpu_custom_call.1} parent=1 // pred_region
      %61 = dma.done [#allocation7], 256
    $region29: #{tpu_custom_call.1} parent=1 // pred_fallthru
      _
    // Predicated region
    $region30: #{tpu_custom_call.1} parent=1 // pred_check
      _
    $region31: #{tpu_custom_call.1} parent=1 // pred_check_branch
      %63 = sbr.rel (0) target = $region33
    $region32: #{tpu_custom_call.1} parent=1 // pred_region
      %64 = dma.done [#allocation7], 256
    $region33: #{tpu_custom_call.1} parent=1 // pred_fallthru
      _
    %v66 = vld [vmem:[#allocation3] sm:$0xff]
    %v67 = vld [vmem:[#allocation3 + $0x8] sm:$0xff]
    %v68 = vpack.c.bf16 %v67, %v66
    %v69 = vld [vmem:[#allocation6] sm:$0xf]
    %v70 = vld [vmem:[#allocation6 + $0x4] sm:$0xf]
    %v71 = vld [vmem:[#allocation6 + $0x8] sm:$0xf]
    %v72 = vld [vmem:[#allocation6 + $0xc] sm:$0xf]
    %v73 = vld [vmem:[%s2] sm:$0x1]
    %v75 = vlaneseq
    %v76 = vshrl.u32 %v75, 7
    %v77 = vsub.s32 0, %v76
    %v78 = vrot.slane %v73, %v77
    %v84 = vunpack.c.l.b16 %v69
    %v85 = vunpack.c.l.b16 %v70
    %v86 = vunpack.c.l.b16 %v71
    %v87 = vunpack.c.l.b16 %v72
    %v88 = vpack.c.b16 %v85, %v84
    %v89 = vpack.c.b16 %v87, %v86
    %vm92 = vcmask 261120
    %v94 = vsel %vm92, %v68, 0
    %96 = vmatprep.subr.bf16.mxu0 0
    %97 = vmatpush1.bf16.msra.mxu0 %v88
    %98 = vmatprep.subr.bf16.mxu0 0
    %99 = vmatpush1.bf16.msra.mxu0 %v89
    %100 = vmatprep.subr.bf16.mxu0 0
    %101 = vmatpush1.bf16.msra.mxu0 0
    %102 = vmatprep.subr.bf16.mxu0 0
    %103 = vmatpush1.bf16.msra.mxu0 0
    %104 = vmatprep.subr.bf16.mxu0 0
    %105 = vmatpush1.bf16.msra.mxu0 0
    %106 = vmatprep.subr.bf16.mxu0 0
    %107 = vmatpush1.bf16.msra.mxu0 0
    %108 = vmatprep.subr.bf16.mxu0 0
    %109 = vmatpush1.bf16.msra.mxu0 0
    %110 = vmatprep.subr.bf16.mxu0 0
    %111 = vmatpush1.bf16.msra.mxu0 0
    %112 = vmatprep.subr.bf16.mxu0 0
    %113 = vmatpush1.bf16.msra.mxu0 0
    %114 = vmatprep.subr.bf16.mxu0 0
    %115 = vmatpush1.bf16.msra.mxu0 0
    %116 = vmatprep.subr.bf16.mxu0 0
    %117 = vmatpush1.bf16.msra.mxu0 0
    %118 = vmatprep.subr.bf16.mxu0 0
    %119 = vmatpush1.bf16.msra.mxu0 0
    %120 = vmatprep.subr.bf16.mxu0 0
    %121 = vmatpush1.bf16.msra.mxu0 0
    %122 = vmatprep.subr.bf16.mxu0 0
    %123 = vmatpush1.bf16.msra.mxu0 0
    %124 = vmatprep.subr.bf16.mxu0 0
    %125 = vmatpush1.bf16.msra.mxu0 0
    %126 = vmatprep.subr.bf16.mxu0 0
    %127 = vmatpush1.bf16.msra.mxu0 0
    %128 = vmatprep.mubr.bf16.mxu0 0
    %129 = vmatmul.mubr.bf16.gmra.mrb[0].mxu0 %v94
    %v130 = vpop.f32.mrb[0].mxu0
    %v131 = vadd.f32 %v78, %v130
    %v132 = vpop.f32.mrb[0].mxu0
    %v133 = vpop.f32.mrb[0].mxu0
    %v134 = vadd.f32 %v78, %v133
    %v135 = vpop.f32.mrb[0].mxu0
    %136 = vdwg.mxu0
    %vm137 = vcmask 785408
    %138 = vst.msk [vmem:[#allocation2] sm:$0xff] %vm137, %v131
    %139 = vst.msk [vmem:[#allocation2 + $0x8] sm:$0xff] %vm137, %v134
    %v140 = vlaneseq
    %v141 = vshrl.u32 %v140, 7
    %v142 = vlaneseq
    %v143 = vand.u32 %v142, 127
    %vm144 = vcmp.ge.s32.totalorder %v141, %v143
    %v145 = vsel %vm144, 0.0, -1e+30
    %v146 = vld [vmem:[#allocation8] sm:$0xf]
    %v147 = vld [vmem:[#allocation8 + $0x4] sm:$0xf]
    %v148 = vld [vmem:[#allocation8 + $0x8] sm:$0xf]
    %v149 = vld [vmem:[#allocation8 + $0xc] sm:$0xf]
    %v150 = vld [vmem:[%s4] sm:$0x1]
    %v151 = vld [vmem:[#allocation2] sm:$0xff]
    %v152 = vpack.c.bf16 %v151, %v151
    %154 = vrot.lane.b32.xlu0 %v152, 96
    %v155 = vpop.permute.xlu0 %154
    %vm156 = vcmask 64512
    %v158 = vsel %vm156, %v152, 0
    %v161 = vsel %vm156, %v155, 0
    %163 = vmatprep.subr.bf16.mxu0 0
    %164 = vmatpush1.bf16.xpose.msra.mxu0 %v161
    %165 = vmatprep.subr.bf16.mxu0 0
    %166 = vmatpush1.bf16.xpose.msra.mxu0 0
    %167 = vmatprep.subr.bf16.mxu0 0
    %168 = vmatpush1.bf16.xpose.msra.mxu0 0
    %169 = vmatprep.subr.bf16.mxu0 0
    %170 = vmatpush1.bf16.xpose.msra.mxu0 0
    %171 = vmatprep.subr.bf16.mxu0 0
    %172 = vmatpush1.bf16.xpose.msra.mxu0 0
    %173 = vmatprep.subr.bf16.mxu0 0
    %174 = vmatpush1.bf16.xpose.msra.mxu0 0
    %175 = vmatprep.subr.bf16.mxu0 0
    %176 = vmatpush1.bf16.xpose.msra.mxu0 0
    %177 = vmatprep.subr.bf16.mxu0 0
    %178 = vmatpush1.bf16.xpose.msra.mxu0 0
    %179 = vmatprep.subr.bf16.mxu0 0
    %180 = vmatpush1.bf16.xpose.msra.mxu0 0
    %181 = vmatprep.subr.bf16.mxu0 0
    %182 = vmatpush1.bf16.xpose.msra.mxu0 0
    %183 = vmatprep.subr.bf16.mxu0 0
    %184 = vmatpush1.bf16.xpose.msra.mxu0 0
    %185 = vmatprep.subr.bf16.mxu0 0
    %186 = vmatpush1.bf16.xpose.msra.mxu0 0
    %187 = vmatprep.subr.bf16.mxu0 0
    %188 = vmatpush1.bf16.xpose.msra.mxu0 0
    %189 = vmatprep.subr.bf16.mxu0 0
    %190 = vmatpush1.bf16.xpose.msra.mxu0 0
    %191 = vmatprep.subr.bf16.mxu0 0
    %192 = vmatpush1.bf16.xpose.msra.mxu0 0
    %193 = vmatprep.subr.bf16.mxu0 0
    %194 = vmatpush1.bf16.xpose.msra.mxu0 0
    %195 = vmatprep.mubr.bf16.mxu0 0
    %196 = vmatmul.mubr.bf16.gmra.mrb[0].mxu0 %v158
    %v197 = vpop.f32.mrb[0].mxu0
    %v198 = vadd.f32 %v145, %v197
    %v199 = vpop.f32.mrb[0].mxu0
    %v200 = vpop.f32.mrb[0].mxu0
    %v201 = vpop.f32.mrb[0].mxu0
    %202 = vdwg.mxu0
    %v203 = vsel %vm156, %v198, -inf
    %204 = vmax.xlane.f32.xlu0 %v203
    %v205 = vpop.xlane.xlu0 %204
    %v206 = vsub.f32 %v198, %v205
    %v207 = vmul.f32 %v206, 1.442695
    %v208 = vpow.pop %v207
    %v209 = vsel %vm156, %v208, 0.0
    %210 = vadd.xlane.f32.xlu0 %v209
    %v211 = vpop.xlane.xlu0 %210
    %v212 = vrcp.pop %v211
    %v213 = vmul.f32 %v208, %v212
    %v214 = vpack.c.bf16 %v213, %v213
    %215 = vrot.lane.b32.xlu0 %v152, 64
    %v216 = vpop.permute.xlu0 %215
    %v218 = vsel %vm156, %v214, 0
    %vm220 = vcmask 1043456
    %v222 = vsel %vm220, %v216, 0
    %224 = vmatprep.subr.bf16.mxu0 0
    %225 = vmatpush1.bf16.msra.mxu0 %v222
    %226 = vmatprep.subr.bf16.mxu0 0
    %227 = vmatpush1.bf16.msra.mxu0 0
    %228 = vmatprep.subr.bf16.mxu0 0
    %229 = vmatpush1.bf16.msra.mxu0 0
    %230 = vmatprep.subr.bf16.mxu0 0
    %231 = vmatpush1.bf16.msra.mxu0 0
    %232 = vmatprep.subr.bf16.mxu0 0
    %233 = vmatpush1.bf16.msra.mxu0 0
    %234 = vmatprep.subr.bf16.mxu0 0
    %235 = vmatpush1.bf16.msra.mxu0 0
    %236 = vmatprep.subr.bf16.mxu0 0
    %237 = vmatpush1.bf16.msra.mxu0 0
    %238 = vmatprep.subr.bf16.mxu0 0
    %239 = vmatpush1.bf16.msra.mxu0 0
    %240 = vmatprep.subr.bf16.mxu0 0
    %241 = vmatpush1.bf16.msra.mxu0 0
    %242 = vmatprep.subr.bf16.mxu0 0
    %243 = vmatpush1.bf16.msra.mxu0 0
    %244 = vmatprep.subr.bf16.mxu0 0
    %245 = vmatpush1.bf16.msra.mxu0 0
    %246 = vmatprep.subr.bf16.mxu0 0
    %247 = vmatpush1.bf16.msra.mxu0 0
    %248 = vmatprep.subr.bf16.mxu0 0
    %249 = vmatpush1.bf16.msra.mxu0 0
    %250 = vmatprep.subr.bf16.mxu0 0
    %251 = vmatpush1.bf16.msra.mxu0 0
    %252 = vmatprep.subr.bf16.mxu0 0
    %253 = vmatpush1.bf16.msra.mxu0 0
    %254 = vmatprep.subr.bf16.mxu0 0
    %255 = vmatpush1.bf16.msra.mxu0 0
    %256 = vmatprep.mubr.bf16.mxu0 0
    %257 = vmatmul.mubr.bf16.gmra.mrb[0].mxu0 %v218
    %v258 = vpop.f32.mrb[0].mxu0
    %v259 = vadd.f32 0.0, %v258
    %v260 = vpop.f32.mrb[0].mxu0
    %v261 = vpop.f32.mrb[0].mxu0
    %v262 = vpop.f32.mrb[0].mxu0
    %263 = vdwg.mxu0
    %264 = vrot.lane.b32.xlu0 %v152, 120
    %v265 = vpop.permute.xlu0 %264
    %266 = vrot.lane.b32.xlu0 %v152, 88
    %v267 = vpop.permute.xlu0 %266
    %v269 = vsel %vm156, %v265, 0
    %v272 = vsel %vm156, %v267, 0
    %274 = vmatprep.subr.bf16.mxu0 0
    %275 = vmatpush1.bf16.xpose.msra.mxu0 %v272
    %276 = vmatprep.subr.bf16.mxu0 0
    %277 = vmatpush1.bf16.xpose.msra.mxu0 0
    %278 = vmatprep.subr.bf16.mxu0 0
    %279 = vmatpush1.bf16.xpose.msra.mxu0 0
    %280 = vmatprep.subr.bf16.mxu0 0
    %281 = vmatpush1.bf16.xpose.msra.mxu0 0
    %282 = vmatprep.subr.bf16.mxu0 0
    %283 = vmatpush1.bf16.xpose.msra.mxu0 0
    %284 = vmatprep.subr.bf16.mxu0 0
    %285 = vmatpush1.bf16.xpose.msra.mxu0 0
    %286 = vmatprep.subr.bf16.mxu0 0
    %287 = vmatpush1.bf16.xpose.msra.mxu0 0
    %288 = vmatprep.subr.bf16.mxu0 0
    %289 = vmatpush1.bf16.xpose.msra.mxu0 0
    %290 = vmatprep.subr.bf16.mxu0 0
    %291 = vmatpush1.bf16.xpose.msra.mxu0 0
    %292 = vmatprep.subr.bf16.mxu0 0
    %293 = vmatpush1.bf16.xpose.msra.mxu0 0
    %294 = vmatprep.subr.bf16.mxu0 0
    %295 = vmatpush1.bf16.xpose.msra.mxu0 0
    %296 = vmatprep.subr.bf16.mxu0 0
    %297 = vmatpush1.bf16.xpose.msra.mxu0 0
    %298 = vmatprep.subr.bf16.mxu0 0
    %299 = vmatpush1.bf16.xpose.msra.mxu0 0
    %300 = vmatprep.subr.bf16.mxu0 0
    %301 = vmatpush1.bf16.xpose.msra.mxu0 0
    %302 = vmatprep.subr.bf16.mxu0 0
    %303 = vmatpush1.bf16.xpose.msra.mxu0 0
    %304 = vmatprep.subr.bf16.mxu0 0
    %305 = vmatpush1.bf16.xpose.msra.mxu0 0
    %306 = vmatprep.mubr.bf16.mxu0 0
    %307 = vmatmul.mubr.bf16.gmra.mrb[0].mxu0 %v269
    %v308 = vpop.f32.mrb[0].mxu0
    %v309 = vadd.f32 %v145, %v308
    %v310 = vpop.f32.mrb[0].mxu0
    %v311 = vpop.f32.mrb[0].mxu0
    %v312 = vpop.f32.mrb[0].mxu0
    %313 = vdwg.mxu0
    %v314 = vsel %vm156, %v309, -inf
    %315 = vmax.xlane.f32.xlu0 %v314
    %v316 = vpop.xlane.xlu0 %315
    %v317 = vsub.f32 %v309, %v316
    %v318 = vmul.f32 %v317, 1.442695
    %v319 = vpow.pop %v318
    %v320 = vsel %vm156, %v319, 0.0
    %321 = vadd.xlane.f32.xlu0 %v320
    %v322 = vpop.xlane.xlu0 %321
    %v323 = vrcp.pop %v322
    %v324 = vmul.f32 %v319, %v323
    %v325 = vpack.c.bf16 %v324, %v324
    %326 = vrot.lane.b32.xlu0 %v152, 56
    %v327 = vpop.permute.xlu0 %326
    %v329 = vsel %vm156, %v325, 0
    %v332 = vsel %vm220, %v327, 0
    %334 = vmatprep.subr.bf16.mxu0 0
    %335 = vmatpush1.bf16.msra.mxu0 %v332
    %336 = vmatprep.subr.bf16.mxu0 0
    %337 = vmatpush1.bf16.msra.mxu0 0
    %338 = vmatprep.subr.bf16.mxu0 0
    %339 = vmatpush1.bf16.msra.mxu0 0
    %340 = vmatprep.subr.bf16.mxu0 0
    %341 = vmatpush1.bf16.msra.mxu0 0
    %342 = vmatprep.subr.bf16.mxu0 0
    %343 = vmatpush1.bf16.msra.mxu0 0
    %344 = vmatprep.subr.bf16.mxu0 0
    %345 = vmatpush1.bf16.msra.mxu0 0
    %346 = vmatprep.subr.bf16.mxu0 0
    %347 = vmatpush1.bf16.msra.mxu0 0
    %348 = vmatprep.subr.bf16.mxu0 0
    %349 = vmatpush1.bf16.msra.mxu0 0
    %350 = vmatprep.subr.bf16.mxu0 0
    %351 = vmatpush1.bf16.msra.mxu0 0
    %352 = vmatprep.subr.bf16.mxu0 0
    %353 = vmatpush1.bf16.msra.mxu0 0
    %354 = vmatprep.subr.bf16.mxu0 0
    %355 = vmatpush1.bf16.msra.mxu0 0
    %356 = vmatprep.subr.bf16.mxu0 0
    %357 = vmatpush1.bf16.msra.mxu0 0
    %358 = vmatprep.subr.bf16.mxu0 0
    %359 = vmatpush1.bf16.msra.mxu0 0
    %360 = vmatprep.subr.bf16.mxu0 0
    %361 = vmatpush1.bf16.msra.mxu0 0
    %362 = vmatprep.subr.bf16.mxu0 0
    %363 = vmatpush1.bf16.msra.mxu0 0
    %364 = vmatprep.subr.bf16.mxu0 0
    %365 = vmatpush1.bf16.msra.mxu0 0
    %366 = vmatprep.mubr.bf16.mxu0 0
    %367 = vmatmul.mubr.bf16.gmra.mrb[0].mxu0 %v329
    %v368 = vpop.f32.mrb[0].mxu0
    %v369 = vadd.f32 0.0, %v368
    %v370 = vpop.f32.mrb[0].mxu0
    %v371 = vpop.f32.mrb[0].mxu0
    %v372 = vpop.f32.mrb[0].mxu0
    %373 = vdwg.mxu0
    %374 = vrot.lane.b32.xlu0 %v152, 112
    %v375 = vpop.permute.xlu0 %374
    %376 = vrot.lane.b32.xlu0 %v152, 80
    %v377 = vpop.permute.xlu0 %376
    %v379 = vsel %vm156, %v375, 0
    %v382 = vsel %vm156, %v377, 0
    %384 = vmatprep.subr.bf16.mxu0 0
    %385 = vmatpush1.bf16.xpose.msra.mxu0 %v382
    %386 = vmatprep.subr.bf16.mxu0 0
    %387 = vmatpush1.bf16.xpose.msra.mxu0 0
    %388 = vmatprep.subr.bf16.mxu0 0
    %389 = vmatpush1.bf16.xpose.msra.mxu0 0
    %390 = vmatprep.subr.bf16.mxu0 0
    %391 = vmatpush1.bf16.xpose.msra.mxu0 0
    %392 = vmatprep.subr.bf16.mxu0 0
    %393 = vmatpush1.bf16.xpose.msra.mxu0 0
    %394 = vmatprep.subr.bf16.mxu0 0
    %395 = vmatpush1.bf16.xpose.msra.mxu0 0
    %396 = vmatprep.subr.bf16.mxu0 0
    %397 = vmatpush1.bf16.xpose.msra.mxu0 0
    %398 = vmatprep.subr.bf16.mxu0 0
    %399 = vmatpush1.bf16.xpose.msra.mxu0 0
    %400 = vmatprep.subr.bf16.mxu0 0
    %401 = vmatpush1.bf16.xpose.msra.mxu0 0
    %402 = vmatprep.subr.bf16.mxu0 0
    %403 = vmatpush1.bf16.xpose.msra.mxu0 0
    %404 = vmatprep.subr.bf16.mxu0 0
    %405 = vmatpush1.bf16.xpose.msra.mxu0 0
    %406 = vmatprep.subr.bf16.mxu0 0
    %407 = vmatpush1.bf16.xpose.msra.mxu0 0
    %408 = vmatprep.subr.bf16.mxu0 0
    %409 = vmatpush1.bf16.xpose.msra.mxu0 0
    %410 = vmatprep.subr.bf16.mxu0 0
    %411 = vmatpush1.bf16.xpose.msra.mxu0 0
    %412 = vmatprep.subr.bf16.mxu0 0
    %413 = vmatpush1.bf16.xpose.msra.mxu0 0
    %414 = vmatprep.subr.bf16.mxu0 0
    %415 = vmatpush1.bf16.xpose.msra.mxu0 0
    %416 = vmatprep.mubr.bf16.mxu0 0
    %417 = vmatmul.mubr.bf16.gmra.mrb[0].mxu0 %v379
    %v418 = vpop.f32.mrb[0].mxu0
    %v419 = vadd.f32 %v145, %v418
    %v420 = vpop.f32.mrb[0].mxu0
    %v421 = vpop.f32.mrb[0].mxu0
    %v422 = vpop.f32.mrb[0].mxu0
    %423 = vdwg.mxu0
    %v424 = vsel %vm156, %v419, -inf
    %425 = vmax.xlane.f32.xlu0 %v424
    %v426 = vpop.xlane.xlu0 %425
    %v427 = vsub.f32 %v419, %v426
    %v428 = vmul.f32 %v427, 1.442695
    %v429 = vpow.pop %v428
    %v430 = vsel %vm156, %v429, 0.0
    %431 = vadd.xlane.f32.xlu0 %v430
    %v432 = vpop.xlane.xlu0 %431
    %v433 = vrcp.pop %v432
    %v434 = vmul.f32 %v429, %v433
    %v435 = vpack.c.bf16 %v434, %v434
    %436 = vrot.lane.b32.xlu0 %v152, 48
    %v437 = vpop.permute.xlu0 %436
    %v439 = vsel %vm156, %v435, 0
    %v442 = vsel %vm220, %v437, 0
    %444 = vmatprep.subr.bf16.mxu0 0
    %445 = vmatpush1.bf16.msra.mxu0 %v442
    %446 = vmatprep.subr.bf16.mxu0 0
    %447 = vmatpush1.bf16.msra.mxu0 0
    %448 = vmatprep.subr.bf16.mxu0 0
    %449 = vmatpush1.bf16.msra.mxu0 0
    %450 = vmatprep.subr.bf16.mxu0 0
    %451 = vmatpush1.bf16.msra.mxu0 0
    %452 = vmatprep.subr.bf16.mxu0 0
    %453 = vmatpush1.bf16.msra.mxu0 0
    %454 = vmatprep.subr.bf16.mxu0 0
    %455 = vmatpush1.bf16.msra.mxu0 0
    %456 = vmatprep.subr.bf16.mxu0 0
    %457 = vmatpush1.bf16.msra.mxu0 0
    %458 = vmatprep.subr.bf16.mxu0 0
    %459 = vmatpush1.bf16.msra.mxu0 0
    %460 = vmatprep.subr.bf16.mxu0 0
    %461 = vmatpush1.bf16.msra.mxu0 0
    %462 = vmatprep.subr.bf16.mxu0 0
    %463 = vmatpush1.bf16.msra.mxu0 0
    %464 = vmatprep.subr.bf16.mxu0 0
    %465 = vmatpush1.bf16.msra.mxu0 0
    %466 = vmatprep.subr.bf16.mxu0 0
    %467 = vmatpush1.bf16.msra.mxu0 0
    %468 = vmatprep.subr.bf16.mxu0 0
    %469 = vmatpush1.bf16.msra.mxu0 0
    %470 = vmatprep.subr.bf16.mxu0 0
    %471 = vmatpush1.bf16.msra.mxu0 0
    %472 = vmatprep.subr.bf16.mxu0 0
    %473 = vmatpush1.bf16.msra.mxu0 0
    %474 = vmatprep.subr.bf16.mxu0 0
    %475 = vmatpush1.bf16.msra.mxu0 0
    %476 = vmatprep.mubr.bf16.mxu0 0
    %477 = vmatmul.mubr.bf16.gmra.mrb[0].mxu0 %v439
    %v478 = vpop.f32.mrb[0].mxu0
    %v479 = vadd.f32 0.0, %v478
    %v480 = vpop.f32.mrb[0].mxu0
    %v481 = vpop.f32.mrb[0].mxu0
    %v482 = vpop.f32.mrb[0].mxu0
    %483 = vdwg.mxu0
    %484 = vrot.lane.b32.xlu0 %v152, 104
    %v485 = vpop.permute.xlu0 %484
    %486 = vrot.lane.b32.xlu0 %v152, 72
    %v487 = vpop.permute.xlu0 %486
    %v489 = vsel %vm156, %v485, 0
    %v492 = vsel %vm156, %v487, 0
    %494 = vmatprep.subr.bf16.mxu0 0
    %495 = vmatpush1.bf16.xpose.msra.mxu0 %v492
    %496 = vmatprep.subr.bf16.mxu0 0
    %497 = vmatpush1.bf16.xpose.msra.mxu0 0
    %498 = vmatprep.subr.bf16.mxu0 0
    %499 = vmatpush1.bf16.xpose.msra.mxu0 0
    %500 = vmatprep.subr.bf16.mxu0 0
    %501 = vmatpush1.bf16.xpose.msra.mxu0 0
    %502 = vmatprep.subr.bf16.mxu0 0
    %503 = vmatpush1.bf16.xpose.msra.mxu0 0
    %504 = vmatprep.subr.bf16.mxu0 0
    %505 = vmatpush1.bf16.xpose.msra.mxu0 0
    %506 = vmatprep.subr.bf16.mxu0 0
    %507 = vmatpush1.bf16.xpose.msra.mxu0 0
    %508 = vmatprep.subr.bf16.mxu0 0
    %509 = vmatpush1.bf16.xpose.msra.mxu0 0
    %510 = vmatprep.subr.bf16.mxu0 0
    %511 = vmatpush1.bf16.xpose.msra.mxu0 0
    %512 = vmatprep.subr.bf16.mxu0 0
    %513 = vmatpush1.bf16.xpose.msra.mxu0 0
    %514 = vmatprep.subr.bf16.mxu0 0
    %515 = vmatpush1.bf16.xpose.msra.mxu0 0
    %516 = vmatprep.subr.bf16.mxu0 0
    %517 = vmatpush1.bf16.xpose.msra.mxu0 0
    %518 = vmatprep.subr.bf16.mxu0 0
    %519 = vmatpush1.bf16.xpose.msra.mxu0 0
    %520 = vmatprep.subr.bf16.mxu0 0
    %521 = vmatpush1.bf16.xpose.msra.mxu0 0
    %522 = vmatprep.subr.bf16.mxu0 0
    %523 = vmatpush1.bf16.xpose.msra.mxu0 0
    %524 = vmatprep.subr.bf16.mxu0 0
    %525 = vmatpush1.bf16.xpose.msra.mxu0 0
    %526 = vmatprep.mubr.bf16.mxu0 0
    %527 = vmatmul.mubr.bf16.gmra.mrb[0].mxu0 %v489
    %v528 = vpop.f32.mrb[0].mxu0
    %v529 = vadd.f32 %v145, %v528
    %v530 = vpop.f32.mrb[0].mxu0
    %v531 = vpop.f32.mrb[0].mxu0
    %v532 = vpop.f32.mrb[0].mxu0
    %533 = vdwg.mxu0
    %v534 = vsel %vm156, %v529, -inf
    %535 = vmax.xlane.f32.xlu0 %v534
    %v536 = vpop.xlane.xlu0 %535
    %v537 = vsub.f32 %v529, %v536
    %v538 = vmul.f32 %v537, 1.442695
    %v539 = vpow.pop %v538
    %v540 = vsel %vm156, %v539, 0.0
    %541 = vadd.xlane.f32.xlu0 %v540
    %v542 = vpop.xlane.xlu0 %541
    %v543 = vrcp.pop %v542
    %v544 = vmul.f32 %v539, %v543
    %v545 = vpack.c.bf16 %v544, %v544
    %546 = vrot.lane.b32.xlu0 %v152, 40
    %v547 = vpop.permute.xlu0 %546
    %v549 = vsel %vm156, %v545, 0
    %v552 = vsel %vm220, %v547, 0
    %554 = vmatprep.subr.bf16.mxu0 0
    %555 = vmatpush1.bf16.msra.mxu0 %v552
    %556 = vmatprep.subr.bf16.mxu0 0
    %557 = vmatpush1.bf16.msra.mxu0 0
    %558 = vmatprep.subr.bf16.mxu0 0
    %559 = vmatpush1.bf16.msra.mxu0 0
    %560 = vmatprep.subr.bf16.mxu0 0
    %561 = vmatpush1.bf16.msra.mxu0 0
    %562 = vmatprep.subr.bf16.mxu0 0
    %563 = vmatpush1.bf16.msra.mxu0 0
    %564 = vmatprep.subr.bf16.mxu0 0
    %565 = vmatpush1.bf16.msra.mxu0 0
    %566 = vmatprep.subr.bf16.mxu0 0
    %567 = vmatpush1.bf16.msra.mxu0 0
    %568 = vmatprep.subr.bf16.mxu0 0
    %569 = vmatpush1.bf16.msra.mxu0 0
    %570 = vmatprep.subr.bf16.mxu0 0
    %571 = vmatpush1.bf16.msra.mxu0 0
    %572 = vmatprep.subr.bf16.mxu0 0
    %573 = vmatpush1.bf16.msra.mxu0 0
    %574 = vmatprep.subr.bf16.mxu0 0
    %575 = vmatpush1.bf16.msra.mxu0 0
    %576 = vmatprep.subr.bf16.mxu0 0
    %577 = vmatpush1.bf16.msra.mxu0 0
    %578 = vmatprep.subr.bf16.mxu0 0
    %579 = vmatpush1.bf16.msra.mxu0 0
    %580 = vmatprep.subr.bf16.mxu0 0
    %581 = vmatpush1.bf16.msra.mxu0 0
    %582 = vmatprep.subr.bf16.mxu0 0
    %583 = vmatpush1.bf16.msra.mxu0 0
    %584 = vmatprep.subr.bf16.mxu0 0
    %585 = vmatpush1.bf16.msra.mxu0 0
    %586 = vmatprep.mubr.bf16.mxu0 0
    %587 = vmatmul.mubr.bf16.gmra.mrb[0].mxu0 %v549
    %v588 = vpop.f32.mrb[0].mxu0
    %v589 = vadd.f32 0.0, %v588
    %v590 = vpop.f32.mrb[0].mxu0
    %v591 = vpop.f32.mrb[0].mxu0
    %v592 = vpop.f32.mrb[0].mxu0
    %593 = vdwg.mxu0
    %595 = vrot.lane.b32.xlu0 %v369, 8
    %v596 = vpop.permute.xlu0 %595
    %599 = vrot.lane.b32.xlu0 %v479, 16
    %v600 = vpop.permute.xlu0 %599
    %603 = vrot.lane.b32.xlu0 %v589, 24
    %v604 = vpop.permute.xlu0 %603
    %v606 = vsel %vm156, %v259, %v596
    %vm607 = vcmask 130048
    %v608 = vsel %vm607, %v606, %v600
    %vm609 = vcmask 195584
    %v610 = vsel %vm609, %v608, %v604
    %612 = vrot.lane.b32.xlu0 %v324, 8
    %v613 = vpop.permute.xlu0 %612
    %616 = vrot.lane.b32.xlu0 %v434, 16
    %v617 = vpop.permute.xlu0 %616
    %620 = vrot.lane.b32.xlu0 %v544, 24
    %v621 = vpop.permute.xlu0 %620
    %v623 = vsel %vm156, %v213, %v613
    %v624 = vsel %vm607, %v623, %v617
    %v625 = vsel %vm609, %v624, %v621
    %626 = vst.msk [vmem:[#allocation10] sm:$0xff] %vm92, %v625
    %v627 = vld [vmem:[#allocation2 + $0x8] sm:$0xff]
    %v628 = vpack.c.bf16 %v627, %v627
    %630 = vrot.lane.b32.xlu0 %v628, 96
    %v631 = vpop.permute.xlu0 %630
    %v633 = vsel %vm156, %v628, 0
    %v636 = vsel %vm156, %v631, 0
    %638 = vmatprep.subr.bf16.mxu0 0
    %639 = vmatpush1.bf16.xpose.msra.mxu0 %v636
    %640 = vmatprep.subr.bf16.mxu0 0
    %641 = vmatpush1.bf16.xpose.msra.mxu0 0
    %642 = vmatprep.subr.bf16.mxu0 0
    %643 = vmatpush1.bf16.xpose.msra.mxu0 0
    %644 = vmatprep.subr.bf16.mxu0 0
    %645 = vmatpush1.bf16.xpose.msra.mxu0 0
    %646 = vmatprep.subr.bf16.mxu0 0
    %647 = vmatpush1.bf16.xpose.msra.mxu0 0
    %648 = vmatprep.subr.bf16.mxu0 0
    %649 = vmatpush1.bf16.xpose.msra.mxu0 0
    %650 = vmatprep.subr.bf16.mxu0 0
    %651 = vmatpush1.bf16.xpose.msra.mxu0 0
    %652 = vmatprep.subr.bf16.mxu0 0
    %653 = vmatpush1.bf16.xpose.msra.mxu0 0
    %654 = vmatprep.subr.bf16.mxu0 0
    %655 = vmatpush1.bf16.xpose.msra.mxu0 0
    %656 = vmatprep.subr.bf16.mxu0 0
    %657 = vmatpush1.bf16.xpose.msra.mxu0 0
    %658 = vmatprep.subr.bf16.mxu0 0
    %659 = vmatpush1.bf16.xpose.msra.mxu0 0
    %660 = vmatprep.subr.bf16.mxu0 0
    %661 = vmatpush1.bf16.xpose.msra.mxu0 0
    %662 = vmatprep.subr.bf16.mxu0 0
    %663 = vmatpush1.bf16.xpose.msra.mxu0 0
    %664 = vmatprep.subr.bf16.mxu0 0
    %665 = vmatpush1.bf16.xpose.msra.mxu0 0
    %666 = vmatprep.subr.bf16.mxu0 0
    %667 = vmatpush1.bf16.xpose.msra.mxu0 0
    %668 = vmatprep.subr.bf16.mxu0 0
    %669 = vmatpush1.bf16.xpose.msra.mxu0 0
    %670 = vmatprep.mubr.bf16.mxu0 0
    %671 = vmatmul.mubr.bf16.gmra.mrb[0].mxu0 %v633
    %v672 = vpop.f32.mrb[0].mxu0
    %v673 = vadd.f32 %v145, %v672
    %v674 = vpop.f32.mrb[0].mxu0
    %v675 = vpop.f32.mrb[0].mxu0
    %v676 = vpop.f32.mrb[0].mxu0
    %677 = vdwg.mxu0
    %v678 = vsel %vm156, %v673, -inf
    %679 = vmax.xlane.f32.xlu0 %v678
    %v680 = vpop.xlane.xlu0 %679
    %v681 = vsub.f32 %v673, %v680
    %v682 = vmul.f32 %v681, 1.442695
    %v683 = vpow.pop %v682
    %v684 = vsel %vm156, %v683, 0.0
    %685 = vadd.xlane.f32.xlu0 %v684
    %v686 = vpop.xlane.xlu0 %685
    %v687 = vrcp.pop %v686
    %v688 = vmul.f32 %v683, %v687
    %v689 = vpack.c.bf16 %v688, %v688
    %690 = vrot.lane.b32.xlu0 %v628, 64
    %v691 = vpop.permute.xlu0 %690
    %v693 = vsel %vm156, %v689, 0
    %v696 = vsel %vm220, %v691, 0
    %698 = vmatprep.subr.bf16.mxu0 0
    %699 = vmatpush1.bf16.msra.mxu0 %v696
    %700 = vmatprep.subr.bf16.mxu0 0
    %701 = vmatpush1.bf16.msra.mxu0 0
    %702 = vmatprep.subr.bf16.mxu0 0
    %703 = vmatpush1.bf16.msra.mxu0 0
    %704 = vmatprep.subr.bf16.mxu0 0
    %705 = vmatpush1.bf16.msra.mxu0 0
    %706 = vmatprep.subr.bf16.mxu0 0
    %707 = vmatpush1.bf16.msra.mxu0 0
    %708 = vmatprep.subr.bf16.mxu0 0
    %709 = vmatpush1.bf16.msra.mxu0 0
    %710 = vmatprep.subr.bf16.mxu0 0
    %711 = vmatpush1.bf16.msra.mxu0 0
    %712 = vmatprep.subr.bf16.mxu0 0
    %713 = vmatpush1.bf16.msra.mxu0 0
    %714 = vmatprep.subr.bf16.mxu0 0
    %715 = vmatpush1.bf16.msra.mxu0 0
    %716 = vmatprep.subr.bf16.mxu0 0
    %717 = vmatpush1.bf16.msra.mxu0 0
    %718 = vmatprep.subr.bf16.mxu0 0
    %719 = vmatpush1.bf16.msra.mxu0 0
    %720 = vmatprep.subr.bf16.mxu0 0
    %721 = vmatpush1.bf16.msra.mxu0 0
    %722 = vmatprep.subr.bf16.mxu0 0
    %723 = vmatpush1.bf16.msra.mxu0 0
    %724 = vmatprep.subr.bf16.mxu0 0
    %725 = vmatpush1.bf16.msra.mxu0 0
    %726 = vmatprep.subr.bf16.mxu0 0
    %727 = vmatpush1.bf16.msra.mxu0 0
    %728 = vmatprep.subr.bf16.mxu0 0
    %729 = vmatpush1.bf16.msra.mxu0 0
    %730 = vmatprep.mubr.bf16.mxu0 0
    %731 = vmatmul.mubr.bf16.gmra.mrb[0].mxu0 %v693
    %v732 = vpop.f32.mrb[0].mxu0
    %v733 = vadd.f32 0.0, %v732
    %v734 = vpop.f32.mrb[0].mxu0
    %v735 = vpop.f32.mrb[0].mxu0
    %v736 = vpop.f32.mrb[0].mxu0
    %737 = vdwg.mxu0
    %738 = vrot.lane.b32.xlu0 %v628, 120
    %v739 = vpop.permute.xlu0 %738
    %740 = vrot.lane.b32.xlu0 %v628, 88
    %v741 = vpop.permute.xlu0 %740
    %v743 = vsel %vm156, %v739, 0
    %v746 = vsel %vm156, %v741, 0
    %748 = vmatprep.subr.bf16.mxu0 0
    %749 = vmatpush1.bf16.xpose.msra.mxu0 %v746
    %750 = vmatprep.subr.bf16.mxu0 0
    %751 = vmatpush1.bf16.xpose.msra.mxu0 0
    %752 = vmatprep.subr.bf16.mxu0 0
    %753 = vmatpush1.bf16.xpose.msra.mxu0 0
    %754 = vmatprep.subr.bf16.mxu0 0
    %755 = vmatpush1.bf16.xpose.msra.mxu0 0
    %756 = vmatprep.subr.bf16.mxu0 0
    %757 = vmatpush1.bf16.xpose.msra.mxu0 0
    %758 = vmatprep.subr.bf16.mxu0 0
    %759 = vmatpush1.bf16.xpose.msra.mxu0 0
    %760 = vmatprep.subr.bf16.mxu0 0
    %761 = vmatpush1.bf16.xpose.msra.mxu0 0
    %762 = vmatprep.subr.bf16.mxu0 0
    %763 = vmatpush1.bf16.xpose.msra.mxu0 0
    %764 = vmatprep.subr.bf16.mxu0 0
    %765 = vmatpush1.bf16.xpose.msra.mxu0 0
    %766 = vmatprep.subr.bf16.mxu0 0
    %767 = vmatpush1.bf16.xpose.msra.mxu0 0
    %768 = vmatprep.subr.bf16.mxu0 0
    %769 = vmatpush1.bf16.xpose.msra.mxu0 0
    %770 = vmatprep.subr.bf16.mxu0 0
    %771 = vmatpush1.bf16.xpose.msra.mxu0 0
    %772 = vmatprep.subr.bf16.mxu0 0
    %773 = vmatpush1.bf16.xpose.msra.mxu0 0
    %774 = vmatprep.subr.bf16.mxu0 0
    %775 = vmatpush1.bf16.xpose.msra.mxu0 0
    %776 = vmatprep.subr.bf16.mxu0 0
    %777 = vmatpush1.bf16.xpose.msra.mxu0 0
    %778 = vmatprep.subr.bf16.mxu0 0
    %779 = vmatpush1.bf16.xpose.msra.mxu0 0
    %780 = vmatprep.mubr.bf16.mxu0 0
    %781 = vmatmul.mubr.bf16.gmra.mrb[0].mxu0 %v743
    %v782 = vpop.f32.mrb[0].mxu0
    %v783 = vadd.f32 %v145, %v782
    %v784 = vpop.f32.mrb[0].mxu0
    %v785 = vpop.f32.mrb[0].mxu0
    %v786 = vpop.f32.mrb[0].mxu0
    %787 = vdwg.mxu0
    %v788 = vsel %vm156, %v783, -inf
    %789 = vmax.xlane.f32.xlu0 %v788
    %v790 = vpop.xlane.xlu0 %789
    %v791 = vsub.f32 %v783, %v790
    %v792 = vmul.f32 %v791, 1.442695
    %v793 = vpow.pop %v792
    %v794 = vsel %vm156, %v793, 0.0
    %795 = vadd.xlane.f32.xlu0 %v794
    %v796 = vpop.xlane.xlu0 %795
    %v797 = vrcp.pop %v796
    %v798 = vmul.f32 %v793, %v797
    %v799 = vpack.c.bf16 %v798, %v798
    %800 = vrot.lane.b32.xlu0 %v628, 56
    %v801 = vpop.permute.xlu0 %800
    %v803 = vsel %vm156, %v799, 0
    %v806 = vsel %vm220, %v801, 0
    %808 = vmatprep.subr.bf16.mxu0 0
    %809 = vmatpush1.bf16.msra.mxu0 %v806
    %810 = vmatprep.subr.bf16.mxu0 0
    %811 = vmatpush1.bf16.msra.mxu0 0
    %812 = vmatprep.subr.bf16.mxu0 0
    %813 = vmatpush1.bf16.msra.mxu0 0
    %814 = vmatprep.subr.bf16.mxu0 0
    %815 = vmatpush1.bf16.msra.mxu0 0
    %816 = vmatprep.subr.bf16.mxu0 0
    %817 = vmatpush1.bf16.msra.mxu0 0
    %818 = vmatprep.subr.bf16.mxu0 0
    %819 = vmatpush1.bf16.msra.mxu0 0
    %820 = vmatprep.subr.bf16.mxu0 0
    %821 = vmatpush1.bf16.msra.mxu0 0
    %822 = vmatprep.subr.bf16.mxu0 0
    %823 = vmatpush1.bf16.msra.mxu0 0
    %824 = vmatprep.subr.bf16.mxu0 0
    %825 = vmatpush1.bf16.msra.mxu0 0
    %826 = vmatprep.subr.bf16.mxu0 0
    %827 = vmatpush1.bf16.msra.mxu0 0
    %828 = vmatprep.subr.bf16.mxu0 0
    %829 = vmatpush1.bf16.msra.mxu0 0
    %830 = vmatprep.subr.bf16.mxu0 0
    %831 = vmatpush1.bf16.msra.mxu0 0
    %832 = vmatprep.subr.bf16.mxu0 0
    %833 = vmatpush1.bf16.msra.mxu0 0
    %834 = vmatprep.subr.bf16.mxu0 0
    %835 = vmatpush1.bf16.msra.mxu0 0
    %836 = vmatprep.subr.bf16.mxu0 0
    %837 = vmatpush1.bf16.msra.mxu0 0
    %838 = vmatprep.subr.bf16.mxu0 0
    %839 = vmatpush1.bf16.msra.mxu0 0
    %840 = vmatprep.mubr.bf16.mxu0 0
    %841 = vmatmul.mubr.bf16.gmra.mrb[0].mxu0 %v803
    %v842 = vpop.f32.mrb[0].mxu0
    %v843 = vadd.f32 0.0, %v842
    %v844 = vpop.f32.mrb[0].mxu0
    %v845 = vpop.f32.mrb[0].mxu0
    %v846 = vpop.f32.mrb[0].mxu0
    %847 = vdwg.mxu0
    %848 = vrot.lane.b32.xlu0 %v628, 112
    %v849 = vpop.permute.xlu0 %848
    %850 = vrot.lane.b32.xlu0 %v628, 80
    %v851 = vpop.permute.xlu0 %850
    %v853 = vsel %vm156, %v849, 0
    %v856 = vsel %vm156, %v851, 0
    %858 = vmatprep.subr.bf16.mxu0 0
    %859 = vmatpush1.bf16.xpose.msra.mxu0 %v856
    %860 = vmatprep.subr.bf16.mxu0 0
    %861 = vmatpush1.bf16.xpose.msra.mxu0 0
    %862 = vmatprep.subr.bf16.mxu0 0
    %863 = vmatpush1.bf16.xpose.msra.mxu0 0
    %864 = vmatprep.subr.bf16.mxu0 0
    %865 = vmatpush1.bf16.xpose.msra.mxu0 0
    %866 = vmatprep.subr.bf16.mxu0 0
    %867 = vmatpush1.bf16.xpose.msra.mxu0 0
    %868 = vmatprep.subr.bf16.mxu0 0
    %869 = vmatpush1.bf16.xpose.msra.mxu0 0
    %870 = vmatprep.subr.bf16.mxu0 0
    %871 = vmatpush1.bf16.xpose.msra.mxu0 0
    %872 = vmatprep.subr.bf16.mxu0 0
    %873 = vmatpush1.bf16.xpose.msra.mxu0 0
    %874 = vmatprep.subr.bf16.mxu0 0
    %875 = vmatpush1.bf16.xpose.msra.mxu0 0
    %876 = vmatprep.subr.bf16.mxu0 0
    %877 = vmatpush1.bf16.xpose.msra.mxu0 0
    %878 = vmatprep.subr.bf16.mxu0 0
    %879 = vmatpush1.bf16.xpose.msra.mxu0 0
    %880 = vmatprep.subr.bf16.mxu0 0
    %881 = vmatpush1.bf16.xpose.msra.mxu0 0
    %882 = vmatprep.subr.bf16.mxu0 0
    %883 = vmatpush1.bf16.xpose.msra.mxu0 0
    %884 = vmatprep.subr.bf16.mxu0 0
    %885 = vmatpush1.bf16.xpose.msra.mxu0 0
    %886 = vmatprep.subr.bf16.mxu0 0
    %887 = vmatpush1.bf16.xpose.msra.mxu0 0
    %888 = vmatprep.subr.bf16.mxu0 0
    %889 = vmatpush1.bf16.xpose.msra.mxu0 0
    %890 = vmatprep.mubr.bf16.mxu0 0
    %891 = vmatmul.mubr.bf16.gmra.mrb[0].mxu0 %v853
    %v892 = vpop.f32.mrb[0].mxu0
    %v893 = vadd.f32 %v145, %v892
    %v894 = vpop.f32.mrb[0].mxu0
    %v895 = vpop.f32.mrb[0].mxu0
    %v896 = vpop.f32.mrb[0].mxu0
    %897 = vdwg.mxu0
    %v898 = vsel %vm156, %v893, -inf
    %899 = vmax.xlane.f32.xlu0 %v898
    %v900 = vpop.xlane.xlu0 %899
    %v901 = vsub.f32 %v893, %v900
    %v902 = vmul.f32 %v901, 1.442695
    %v903 = vpow.pop %v902
    %v904 = vsel %vm156, %v903, 0.0
    %905 = vadd.xlane.f32.xlu0 %v904
    %v906 = vpop.xlane.xlu0 %905
    %v907 = vrcp.pop %v906
    %v908 = vmul.f32 %v903, %v907
    %v909 = vpack.c.bf16 %v908, %v908
    %910 = vrot.lane.b32.xlu0 %v628, 48
    %v911 = vpop.permute.xlu0 %910
    %v913 = vsel %vm156, %v909, 0
    %v916 = vsel %vm220, %v911, 0
    %918 = vmatprep.subr.bf16.mxu0 0
    %919 = vmatpush1.bf16.msra.mxu0 %v916
    %920 = vmatprep.subr.bf16.mxu0 0
    %921 = vmatpush1.bf16.msra.mxu0 0
    %922 = vmatprep.subr.bf16.mxu0 0
    %923 = vmatpush1.bf16.msra.mxu0 0
    %924 = vmatprep.subr.bf16.mxu0 0
    %925 = vmatpush1.bf16.msra.mxu0 0
    %926 = vmatprep.subr.bf16.mxu0 0
    %927 = vmatpush1.bf16.msra.mxu0 0
    %928 = vmatprep.subr.bf16.mxu0 0
    %929 = vmatpush1.bf16.msra.mxu0 0
    %930 = vmatprep.subr.bf16.mxu0 0
    %931 = vmatpush1.bf16.msra.mxu0 0
    %932 = vmatprep.subr.bf16.mxu0 0
    %933 = vmatpush1.bf16.msra.mxu0 0
    %934 = vmatprep.subr.bf16.mxu0 0
    %935 = vmatpush1.bf16.msra.mxu0 0
    %936 = vmatprep.subr.bf16.mxu0 0
    %937 = vmatpush1.bf16.msra.mxu0 0
    %938 = vmatprep.subr.bf16.mxu0 0
    %939 = vmatpush1.bf16.msra.mxu0 0
    %940 = vmatprep.subr.bf16.mxu0 0
    %941 = vmatpush1.bf16.msra.mxu0 0
    %942 = vmatprep.subr.bf16.mxu0 0
    %943 = vmatpush1.bf16.msra.mxu0 0
    %944 = vmatprep.subr.bf16.mxu0 0
    %945 = vmatpush1.bf16.msra.mxu0 0
    %946 = vmatprep.subr.bf16.mxu0 0
    %947 = vmatpush1.bf16.msra.mxu0 0
    %948 = vmatprep.subr.bf16.mxu0 0
    %949 = vmatpush1.bf16.msra.mxu0 0
    %950 = vmatprep.mubr.bf16.mxu0 0
    %951 = vmatmul.mubr.bf16.gmra.mrb[0].mxu0 %v913
    %v952 = vpop.f32.mrb[0].mxu0
    %v953 = vadd.f32 0.0, %v952
    %v954 = vpop.f32.mrb[0].mxu0
    %v955 = vpop.f32.mrb[0].mxu0
    %v956 = vpop.f32.mrb[0].mxu0
    %957 = vdwg.mxu0
    %958 = vrot.lane.b32.xlu0 %v628, 104
    %v959 = vpop.permute.xlu0 %958
    %960 = vrot.lane.b32.xlu0 %v628, 72
    %v961 = vpop.permute.xlu0 %960
    %v963 = vsel %vm156, %v959, 0
    %v966 = vsel %vm156, %v961, 0
    %968 = vmatprep.subr.bf16.mxu0 0
    %969 = vmatpush1.bf16.xpose.msra.mxu0 %v966
    %970 = vmatprep.subr.bf16.mxu0 0
    %971 = vmatpush1.bf16.xpose.msra.mxu0 0
    %972 = vmatprep.subr.bf16.mxu0 0
    %973 = vmatpush1.bf16.xpose.msra.mxu0 0
    %974 = vmatprep.subr.bf16.mxu0 0
    %975 = vmatpush1.bf16.xpose.msra.mxu0 0
    %976 = vmatprep.subr.bf16.mxu0 0
    %977 = vmatpush1.bf16.xpose.msra.mxu0 0
    %978 = vmatprep.subr.bf16.mxu0 0
    %979 = vmatpush1.bf16.xpose.msra.mxu0 0
    %980 = vmatprep.subr.bf16.mxu0 0
    %981 = vmatpush1.bf16.xpose.msra.mxu0 0
    %982 = vmatprep.subr.bf16.mxu0 0
    %983 = vmatpush1.bf16.xpose.msra.mxu0 0
    %984 = vmatprep.subr.bf16.mxu0 0
    %985 = vmatpush1.bf16.xpose.msra.mxu0 0
    %986 = vmatprep.subr.bf16.mxu0 0
    %987 = vmatpush1.bf16.xpose.msra.mxu0 0
    %988 = vmatprep.subr.bf16.mxu0 0
    %989 = vmatpush1.bf16.xpose.msra.mxu0 0
    %990 = vmatprep.subr.bf16.mxu0 0
    %991 = vmatpush1.bf16.xpose.msra.mxu0 0
    %992 = vmatprep.subr.bf16.mxu0 0
    %993 = vmatpush1.bf16.xpose.msra.mxu0 0
    %994 = vmatprep.subr.bf16.mxu0 0
    %995 = vmatpush1.bf16.xpose.msra.mxu0 0
    %996 = vmatprep.subr.bf16.mxu0 0
    %997 = vmatpush1.bf16.xpose.msra.mxu0 0
    %998 = vmatprep.subr.bf16.mxu0 0
    %999 = vmatpush1.bf16.xpose.msra.mxu0 0
    %1000 = vmatprep.mubr.bf16.mxu0 0
    %1001 = vmatmul.mubr.bf16.gmra.mrb[0].mxu0 %v963
    %v1002 = vpop.f32.mrb[0].mxu0
    %v1003 = vadd.f32 %v145, %v1002
    %v1004 = vpop.f32.mrb[0].mxu0
    %v1005 = vpop.f32.mrb[0].mxu0
    %v1006 = vpop.f32.mrb[0].mxu0
    %1007 = vdwg.mxu0
    %v1008 = vsel %vm156, %v1003, -inf
    %1009 = vmax.xlane.f32.xlu0 %v1008
    %v1010 = vpop.xlane.xlu0 %1009
    %v1011 = vsub.f32 %v1003, %v1010
    %v1012 = vmul.f32 %v1011, 1.442695
    %v1013 = vpow.pop %v1012
    %v1014 = vsel %vm156, %v1013, 0.0
    %1015 = vadd.xlane.f32.xlu0 %v1014
    %v1016 = vpop.xlane.xlu0 %1015
    %v1017 = vrcp.pop %v1016
    %v1018 = vmul.f32 %v1013, %v1017
    %v1019 = vpack.c.bf16 %v1018, %v1018
    %1020 = vrot.lane.b32.xlu0 %v628, 40
    %v1021 = vpop.permute.xlu0 %1020
    %v1023 = vsel %vm156, %v1019, 0
    %v1026 = vsel %vm220, %v1021, 0
    %1028 = vmatprep.subr.bf16.mxu0 0
    %1029 = vmatpush1.bf16.msra.mxu0 %v1026
    %1030 = vmatprep.subr.bf16.mxu0 0
    %1031 = vmatpush1.bf16.msra.mxu0 0
    %1032 = vmatprep.subr.bf16.mxu0 0
    %1033 = vmatpush1.bf16.msra.mxu0 0
    %1034 = vmatprep.subr.bf16.mxu0 0
    %1035 = vmatpush1.bf16.msra.mxu0 0
    %1036 = vmatprep.subr.bf16.mxu0 0
    %1037 = vmatpush1.bf16.msra.mxu0 0
    %1038 = vmatprep.subr.bf16.mxu0 0
    %1039 = vmatpush1.bf16.msra.mxu0 0
    %1040 = vmatprep.subr.bf16.mxu0 0
    %1041 = vmatpush1.bf16.msra.mxu0 0
    %1042 = vmatprep.subr.bf16.mxu0 0
    %1043 = vmatpush1.bf16.msra.mxu0 0
    %1044 = vmatprep.subr.bf16.mxu0 0
    %1045 = vmatpush1.bf16.msra.mxu0 0
    %1046 = vmatprep.subr.bf16.mxu0 0
    %1047 = vmatpush1.bf16.msra.mxu0 0
    %1048 = vmatprep.subr.bf16.mxu0 0
    %1049 = vmatpush1.bf16.msra.mxu0 0
    %1050 = vmatprep.subr.bf16.mxu0 0
    %1051 = vmatpush1.bf16.msra.mxu0 0
    %1052 = vmatprep.subr.bf16.mxu0 0
    %1053 = vmatpush1.bf16.msra.mxu0 0
    %1054 = vmatprep.subr.bf16.mxu0 0
    %1055 = vmatpush1.bf16.msra.mxu0 0
    %1056 = vmatprep.subr.bf16.mxu0 0
    %1057 = vmatpush1.bf16.msra.mxu0 0
    %1058 = vmatprep.subr.bf16.mxu0 0
    %1059 = vmatpush1.bf16.msra.mxu0 0
    %1060 = vmatprep.mubr.bf16.mxu0 0
    %1061 = vmatmul.mubr.bf16.gmra.mrb[0].mxu0 %v1023
    %v1062 = vpop.f32.mrb[0].mxu0
    %v1063 = vadd.f32 0.0, %v1062
    %v1064 = vpop.f32.mrb[0].mxu0
    %v1065 = vpop.f32.mrb[0].mxu0
    %v1066 = vpop.f32.mrb[0].mxu0
    %1067 = vdwg.mxu0
    %1069 = vrot.lane.b32.xlu0 %v843, 8
    %v1070 = vpop.permute.xlu0 %1069
    %1073 = vrot.lane.b32.xlu0 %v953, 16
    %v1074 = vpop.permute.xlu0 %1073
    %1077 = vrot.lane.b32.xlu0 %v1063, 24
    %v1078 = vpop.permute.xlu0 %1077
    %v1080 = vsel %vm156, %v733, %v1070
    %v1081 = vsel %vm607, %v1080, %v1074
    %v1082 = vsel %vm609, %v1081, %v1078
    %1084 = vrot.lane.b32.xlu0 %v798, 8
    %v1085 = vpop.permute.xlu0 %1084
    %1088 = vrot.lane.b32.xlu0 %v908, 16
    %v1089 = vpop.permute.xlu0 %1088
    %1092 = vrot.lane.b32.xlu0 %v1018, 24
    %v1093 = vpop.permute.xlu0 %1092
    %v1095 = vsel %vm156, %v688, %v1085
    %v1096 = vsel %vm607, %v1095, %v1089
    %v1097 = vsel %vm609, %v1096, %v1093
    %s1098 = scalar_lea.vmem [#allocation10], 8
    %1099 = vst.msk [vmem:[%s1098] sm:$0xff] %vm92, %v1097
    %v1100 = vpack.c.bf16 %v1082, %v610
    %v1102 = vlaneseq
    %v1103 = vshrl.u32 %v1102, 7
    %v1104 = vsub.s32 0, %v1103
    %v1105 = vrot.slane %v150, %v1104
    %v1111 = vunpack.c.l.b16 %v146
    %v1112 = vunpack.c.l.b16 %v147
    %v1113 = vunpack.c.l.b16 %v148
    %v1114 = vunpack.c.l.b16 %v149
    %v1115 = vpack.c.b16 %v1112, %v1111
    %v1116 = vpack.c.b16 %v1114, %v1113
    %v1120 = vsel %vm92, %v1100, 0
    %1122 = vmatprep.subr.bf16.mxu0 0
    %1123 = vmatpush1.bf16.msra.mxu0 %v1115
    %1124 = vmatprep.subr.bf16.mxu0 0
    %1125 = vmatpush1.bf16.msra.mxu0 %v1116
    %1126 = vmatprep.subr.bf16.mxu0 0
    %1127 = vmatpush1.bf16.msra.mxu0 0
    %1128 = vmatprep.subr.bf16.mxu0 0
    %1129 = vmatpush1.bf16.msra.mxu0 0
    %1130 = vmatprep.subr.bf16.mxu0 0
    %1131 = vmatpush1.bf16.msra.mxu0 0
    %1132 = vmatprep.subr.bf16.mxu0 0
    %1133 = vmatpush1.bf16.msra.mxu0 0
    %1134 = vmatprep.subr.bf16.mxu0 0
    %1135 = vmatpush1.bf16.msra.mxu0 0
    %1136 = vmatprep.subr.bf16.mxu0 0
    %1137 = vmatpush1.bf16.msra.mxu0 0
    %1138 = vmatprep.subr.bf16.mxu0 0
    %1139 = vmatpush1.bf16.msra.mxu0 0
    %1140 = vmatprep.subr.bf16.mxu0 0
    %1141 = vmatpush1.bf16.msra.mxu0 0
    %1142 = vmatprep.subr.bf16.mxu0 0
    %1143 = vmatpush1.bf16.msra.mxu0 0
    %1144 = vmatprep.subr.bf16.mxu0 0
    %1145 = vmatpush1.bf16.msra.mxu0 0
    %1146 = vmatprep.subr.bf16.mxu0 0
    %1147 = vmatpush1.bf16.msra.mxu0 0
    %1148 = vmatprep.subr.bf16.mxu0 0
    %1149 = vmatpush1.bf16.msra.mxu0 0
    %1150 = vmatprep.subr.bf16.mxu0 0
    %1151 = vmatpush1.bf16.msra.mxu0 0
    %1152 = vmatprep.subr.bf16.mxu0 0
    %1153 = vmatpush1.bf16.msra.mxu0 0
    %1154 = vmatprep.mubr.bf16.mxu0 0
    %1155 = vmatmul.mubr.bf16.gmra.mrb[0].mxu0 %v1120
    %v1156 = vpop.f32.mrb[0].mxu0
    %v1157 = vadd.f32 %v1105, %v1156
    %v1158 = vpop.f32.mrb[0].mxu0
    %v1159 = vpop.f32.mrb[0].mxu0
    %v1160 = vadd.f32 %v1105, %v1159
    %v1161 = vpop.f32.mrb[0].mxu0
    %1162 = vdwg.mxu0
    %1163 = vst.msk [vmem:[#allocation9] sm:$0xff] %vm92, %v1157
    %1164 = vst.msk [vmem:[#allocation9 + $0x8] sm:$0xff] %vm92, %v1160
    // Predicated region
    $region34: #{tpu_custom_call.1} parent=1 // pred_check
      _
    $region35: #{tpu_custom_call.1} parent=1 // pred_check_branch
      %1166 = sbr.rel (0) target = $region37
    $region36: #{tpu_custom_call.1} parent=1 // pred_region
      %s1168 = ssub.s32 256, 256
      %1169 = vsyncadd [#allocation5], %s1168
      %s1170 = sshll.u32 [#allocation9], 4
      %s1171 = int_to_ptr.vmem [resolvable:$true] %s1170
      %1176 = dma.vmem_to_hbm [thread:$0]  %s1171, 256, %s5, [#allocation5], 128, 128, 8
    $region37: #{tpu_custom_call.1} parent=1 // pred_fallthru
      _
    // Predicated region
    $region38: #{tpu_custom_call.1} parent=1 // pred_check
      _
    $region39: #{tpu_custom_call.1} parent=1 // pred_check_branch
      %1178 = sbr.rel (0) target = $region41
    $region40: #{tpu_custom_call.1} parent=1 // pred_region
      %s1180 = ssub.s32 256, 256
      %1181 = vsyncadd [#allocation11], %s1180
      %s1182 = sshll.u32 [#allocation10], 4
      %s1183 = int_to_ptr.vmem [resolvable:$true] %s1182
      %1188 = dma.vmem_to_hbm [thread:$0]  %s1183, 256, %s6, [#allocation11], 128, 128, 8
    $region41: #{tpu_custom_call.1} parent=1 // pred_fallthru
      _
    // Predicated region
    $region42: #{tpu_custom_call.1} parent=1 // pred_check
      _
    $region43: #{tpu_custom_call.1} parent=1 // pred_check_branch
      %1190 = sbr.rel (0) target = $region45
    $region44: #{tpu_custom_call.1} parent=1 // pred_region
      %1191 = dma.done [#allocation5], 256
    $region45: #{tpu_custom_call.1} parent=1 // pred_fallthru
      _
    // Predicated region
    $region46: #{tpu_custom_call.1} parent=1 // pred_check
      _
    $region47: #{tpu_custom_call.1} parent=1 // pred_check_branch
      %1193 = sbr.rel (0) target = $region49
    $region48: #{tpu_custom_call.1} parent=1 // pred_region
      %1194 = dma.done [#allocation11], 256
    $region49: #{tpu_custom_call.1} parent=1 // pred_fallthru
      _
    %1195 = vsyncpa [#allocation4], 1
    %1196 = vsyncpa [#allocation7], 1
    %1197 = vsyncpa [#allocation5], 1
    %1198 = vsyncpa [#allocation11], 1

</llo_original>
